<compile_context>
chip_gen: v7x
topology: tpu7x:2x2x1
jax: 0.10.0
libtpu: 0.0.40
codegen_flags: <defaults>
</compile_context>

<pallas_src>
import jax
import jax.numpy as jnp
from jax import lax
from jax.experimental import pallas as pl
from jax.experimental.pallas import tpu as pltpu

# ---- model hyper-parameters (small synthetic shapes) ----
N_NODES = 64          # number of graph nodes
N_FEATS = 32          # dataset.num_node_features
N_HIDDEN = 16         # GCNConv hidden width (matches module)
N_CLASSES = 8         # dataset.num_classes
K_HOPS = 10
ALPHA = 0.1

LANE = 128                      # pad hidden/class lane dims to full vreg width
W1_OFF = 0                      # weight-slab rows [0, F)          : W1 [F, LANE]
WL_OFF = N_FEATS                # weight-slab rows [F, F+LANE)     : Wl [LANE, LANE]
W2_OFF = N_FEATS + LANE         # weight-slab rows [F+LANE, F+2L)  : W2 [LANE, LANE]
W_ROWS = N_FEATS + 2 * LANE     # 288 rows (bf16 slab, 16-row aligned slices)
B_ROWS = 24                     # bias slab: b1 @ row 0, bl @ row 8, b2 @ row 16


def gprgnn_kernel(a_ref, x_ref, w_ref, b_ref, out_ref):
    n = x_ref.shape[0]
    A = a_ref[...]                               # [N, N]   bf16
    x = x_ref[...]                               # [N, F]   bf16

    w1 = w_ref[W1_OFF:W1_OFF + N_FEATS, :]       # [F, LANE]     bf16
    wl = w_ref[WL_OFF:WL_OFF + LANE, :]          # [LANE, LANE]  bf16
    w2 = w_ref[W2_OFF:W2_OFF + LANE, :]          # [LANE, LANE]  bf16
    b1 = b_ref[0:1, :]                           # [1, LANE]     f32
    bl = b_ref[8:9, :]
    b2 = b_ref[16:17, :]

    # conv1: relu(A_hat @ (X @ W1) + b1)   (bf16 MXU operands, f32 accumulate)
    xw = jnp.dot(x, w1, preferred_element_type=jnp.float32)
    h = jnp.dot(A, xw.astype(jnp.bfloat16),
                preferred_element_type=jnp.float32) + b1
    h = jnp.maximum(h, 0.0)

    # GPR propagation: h = alpha * relu(h @ Wl + bl) + (1 - alpha) * h
    # (matches the reference module: plain Linear per hop, no adjacency).
    # Hoist the bias broadcast out of the unrolled loop.
    bl_full = jnp.broadcast_to(bl, (n, LANE))

    def hop(_, h):
        z = jnp.dot(h.astype(jnp.bfloat16), wl,
                    preferred_element_type=jnp.float32) + bl_full
        return ALPHA * jnp.maximum(z, 0.0) + (1.0 - ALPHA) * h

    h = lax.fori_loop(0, K_HOPS, hop, h, unroll=True)   # fully unrolled

    # conv2: A_hat @ (h @ W2) + b2
    hw = jnp.dot(h.astype(jnp.bfloat16), w2, preferred_element_type=jnp.float32)
    out = jnp.dot(A, hw.astype(jnp.bfloat16),
                  preferred_element_type=jnp.float32) + b2

    # log_softmax over the real class lanes only (padded lanes masked out of
    # max/sum); store the full lane-dense [N, 128] slab, wrapper slices.
    col = lax.broadcasted_iota(jnp.int32, out.shape, 1)
    out = jnp.where(col < N_CLASSES, out, -1e30)
    m = jnp.max(out, axis=1, keepdims=True)
    shifted = out - m
    lse = jnp.log(jnp.sum(jnp.exp(shifted), axis=1, keepdims=True))
    out_ref[...] = shifted - lse


def _pad_lane(v):
    return jnp.pad(v, ((0, 0), (0, LANE - v.shape[1])))


def gprgnn_forward(a_hat, x, w1, b1, wl, bl, w2, b2):
    n = x.shape[0]

    # --- pack parameters into two pre-padded slabs (plain JAX glue) ---
    w1p = _pad_lane(w1)                                          # [F, LANE]
    wlp = jnp.pad(wl, ((0, LANE - wl.shape[0]), (0, LANE - wl.shape[1])))
    w2p = jnp.pad(w2, ((0, LANE - w2.shape[0]), (0, LANE - w2.shape[1])))
    w_slab = jnp.concatenate([w1p, wlp, w2p], axis=0).astype(jnp.bfloat16)

    b_slab = jnp.concatenate([
        jnp.pad(_pad_lane(b1), ((0, 7), (0, 0))),                # rows 0..7
        jnp.pad(_pad_lane(bl), ((0, 7), (0, 0))),                # rows 8..15
        jnp.pad(_pad_lane(b2), ((0, 7), (0, 0))),                # rows 16..23
    ], axis=0).astype(jnp.float32)

    a_bf = a_hat.astype(jnp.bfloat16)
    x_bf = x.astype(jnp.bfloat16)

    flops = (2 * n * N_FEATS * LANE            # X @ W1
             + 2 * n * n * LANE                # A @ XW
             + K_HOPS * 2 * n * LANE * LANE    # GPR hops
             + 2 * n * LANE * LANE             # h @ W2
             + 2 * n * n * LANE)               # A @ hW2
    bytes_accessed = (a_bf.size * 2 + x_bf.size * 2 + w_slab.size * 2
                      + b_slab.size * 4 + n * LANE * 4)

    vmem = pl.BlockSpec(memory_space=pltpu.MemorySpace.VMEM)
    out_padded = pl.pallas_call(
        gprgnn_kernel,
        out_shape=jax.ShapeDtypeStruct((n, LANE), jnp.float32),
        in_specs=[vmem, vmem, vmem, vmem],
        out_specs=vmem,
        cost_estimate=pl.CostEstimate(
            flops=flops,
            transcendentals=n * LANE + n,
            bytes_accessed=bytes_accessed),
        compiler_params=pltpu.CompilerParams(vmem_limit_bytes=32 << 20),
    )(a_bf, x_bf, w_slab, b_slab)

    return out_padded[:, :N_CLASSES]


def gprgnn_ref(a_hat, x, w1, b1, wl, bl, w2, b2):
    """Pure-JAX f32 reference of the module's forward."""
    h = jnp.maximum(a_hat @ (x @ w1) + b1, 0.0)
    for _ in range(K_HOPS):
        h = ALPHA * jnp.maximum(h @ wl + bl, 0.0) + (1.0 - ALPHA) * h
    out = a_hat @ (h @ w2) + b2
    return jax.nn.log_softmax(out, axis=1)


def build_normalized_adjacency(edge_index, num_nodes):
    """Dense A_hat = D^{-1/2}(A + I)D^{-1/2} from [2, E] edge_index (plain JAX glue)."""
    src, dst = edge_index[0], edge_index[1]
    A = jnp.zeros((num_nodes, num_nodes), jnp.float32)
    A = A.at[src, dst].set(1.0)
    A = A.at[dst, src].set(1.0)                         # undirected
    eye = jnp.eye(num_nodes, dtype=jnp.float32)
    A = A * (1.0 - eye) + eye                           # self-loops added exactly once
    deg = jnp.sum(A, axis=1)
    d_inv_sqrt = jnp.where(deg > 0, 1.0 / jnp.sqrt(deg), 0.0)
    return A * d_inv_sqrt[:, None] * d_inv_sqrt[None, :]


if __name__ == "__main__":
    key = jax.random.PRNGKey(0)
    k_x, k_e, k_w1, k_b1, k_wl, k_bl, k_w2, k_b2 = jax.random.split(key, 8)

    # deterministic synthetic graph + features
    x = jax.random.normal(k_x, (N_NODES, N_FEATS), jnp.float32)
    edge_index = jax.random.randint(k_e, (2, 4 * N_NODES), 0, N_NODES)
    a_hat = build_normalized_adjacency(edge_index, N_NODES)

    # deterministic parameter init (shapes from the module's __init__)
    w1 = jax.random.normal(k_w1, (N_FEATS, N_HIDDEN), jnp.float32) * 0.1
    b1 = jax.random.normal(k_b1, (1, N_HIDDEN), jnp.float32) * 0.1
    wl = jax.random.normal(k_wl, (N_HIDDEN, N_HIDDEN), jnp.float32) * 0.1
    bl = jax.random.normal(k_bl, (1, N_HIDDEN), jnp.float32) * 0.1
    w2 = jax.random.normal(k_w2, (N_HIDDEN, N_CLASSES), jnp.float32) * 0.1
    b2 = jax.random.normal(k_b2, (1, N_CLASSES), jnp.float32) * 0.1

    out = gprgnn_forward(a_hat, x, w1, b1, wl, bl, w2, b2)
    jax.block_until_ready(out)

    # sanity: shape, normalized log-probs, and agreement with f32 reference
    assert out.shape == (N_NODES, N_CLASSES)
    assert jnp.allclose(jnp.sum(jnp.exp(out), axis=1), 1.0, atol=1e-4)
    ref = gprgnn_ref(a_hat, x, w1, b1, wl, bl, w2, b2)
    assert jnp.allclose(out, ref, atol=5e-2, rtol=5e-2), \
        f"max abs diff {jnp.max(jnp.abs(out - ref))}"

    print("KERNEL_OK")
</pallas_src>

<mosaic_0001>
module attributes {stable_mosaic.version = 11 : i64} {
  func.func @gprgnn_kernel(%arg0: memref<64x64xbf16, #tpu.memory_space<vmem>>, %arg1: memref<64x32xbf16, #tpu.memory_space<vmem>>, %arg2: memref<288x128xbf16, #tpu.memory_space<vmem>>, %arg3: memref<24x128xf32, #tpu.memory_space<vmem>>, %arg4: memref<64x128xf32, #tpu.memory_space<vmem>>) attributes {dimension_semantics = [], scalar_prefetch = 0 : i64, scratch_operands = 0 : i64, tpu.core_type = #tpu.core_type<tc>} {
    %c0 = arith.constant 0 : index
    %c0_0 = arith.constant 0 : index
    %0 = vector.load %arg0[%c0, %c0_0] : memref<64x64xbf16, #tpu.memory_space<vmem>>, vector<64x64xbf16>
    %c0_1 = arith.constant 0 : index
    %c0_2 = arith.constant 0 : index
    %1 = vector.load %arg1[%c0_1, %c0_2] : memref<64x32xbf16, #tpu.memory_space<vmem>>, vector<64x32xbf16>
    %c0_3 = arith.constant 0 : index
    %c0_4 = arith.constant 0 : index
    %2 = vector.load %arg2[%c0_3, %c0_4] : memref<288x128xbf16, #tpu.memory_space<vmem>>, vector<32x128xbf16>
    %c32 = arith.constant 32 : index
    %c0_5 = arith.constant 0 : index
    %3 = vector.load %arg2[%c32, %c0_5] : memref<288x128xbf16, #tpu.memory_space<vmem>>, vector<128x128xbf16>
    %c160 = arith.constant 160 : index
    %c0_6 = arith.constant 0 : index
    %4 = vector.load %arg2[%c160, %c0_6] : memref<288x128xbf16, #tpu.memory_space<vmem>>, vector<128x128xbf16>
    %c0_7 = arith.constant 0 : index
    %c0_8 = arith.constant 0 : index
    %5 = vector.load %arg3[%c0_7, %c0_8] : memref<24x128xf32, #tpu.memory_space<vmem>>, vector<1x128xf32>
    %c8 = arith.constant 8 : index
    %c0_9 = arith.constant 0 : index
    %6 = vector.load %arg3[%c8, %c0_9] : memref<24x128xf32, #tpu.memory_space<vmem>>, vector<1x128xf32>
    %c16 = arith.constant 16 : index
    %c0_10 = arith.constant 0 : index
    %7 = vector.load %arg3[%c16, %c0_10] : memref<24x128xf32, #tpu.memory_space<vmem>>, vector<1x128xf32>
    %cst = arith.constant dense<0.000000e+00> : vector<64x128xf32>
    %8 = tpu.matmul %1, %2, %cst {dimension_numbers = #tpu.dot_dimension_numbers<[1], [0], [0], [1], [0, 0, 1, 1], [], []>} : vector<64x32xbf16>, vector<32x128xbf16>, vector<64x128xf32> -> vector<64x128xf32>
    %9 = arith.truncf %8 : vector<64x128xf32> to vector<64x128xbf16>
    %cst_11 = arith.constant dense<0.000000e+00> : vector<64x128xf32>
    %10 = tpu.matmul %0, %9, %cst_11 {dimension_numbers = #tpu.dot_dimension_numbers<[1], [0], [0], [1], [0, 0, 1, 1], [], []>} : vector<64x64xbf16>, vector<64x128xbf16>, vector<64x128xf32> -> vector<64x128xf32>
    %11 = vector.broadcast %5 : vector<1x128xf32> to vector<64x128xf32>
    %12 = arith.addf %10, %11 : vector<64x128xf32>
    %cst_12 = arith.constant 0.000000e+00 : f32
    %13 = vector.broadcast %cst_12 : f32 to vector<64x128xf32>
    %14 = arith.maximumf %12, %13 : vector<64x128xf32>
    %15 = vector.shape_cast %6 : vector<1x128xf32> to vector<1x128xf32>
    %16 = vector.broadcast %15 : vector<1x128xf32> to vector<64x128xf32>
    %c0_i32 = arith.constant 0 : i32
    %17 = arith.truncf %14 : vector<64x128xf32> to vector<64x128xbf16>
    %cst_13 = arith.constant dense<0.000000e+00> : vector<64x128xf32>
    %18 = tpu.matmul %17, %3, %cst_13 {dimension_numbers = #tpu.dot_dimension_numbers<[1], [0], [0], [1], [0, 0, 1, 1], [], []>} : vector<64x128xbf16>, vector<128x128xbf16>, vector<64x128xf32> -> vector<64x128xf32>
    %19 = arith.addf %18, %16 : vector<64x128xf32>
    %cst_14 = arith.constant 0.000000e+00 : f32
    %20 = vector.broadcast %cst_14 : f32 to vector<64x128xf32>
    %21 = arith.maximumf %19, %20 : vector<64x128xf32>
    %cst_15 = arith.constant 1.000000e-01 : f32
    %22 = vector.broadcast %cst_15 : f32 to vector<64x128xf32>
    %23 = arith.mulf %22, %21 : vector<64x128xf32>
    %cst_16 = arith.constant 0.899999976 : f32
    %24 = vector.broadcast %cst_16 : f32 to vector<64x128xf32>
    %25 = arith.mulf %24, %14 : vector<64x128xf32>
    %26 = arith.addf %23, %25 : vector<64x128xf32>
    %c1_i32 = arith.constant 1 : i32
    %27 = arith.truncf %26 : vector<64x128xf32> to vector<64x128xbf16>
    %cst_17 = arith.constant dense<0.000000e+00> : vector<64x128xf32>
    %28 = tpu.matmul %27, %3, %cst_17 {dimension_numbers = #tpu.dot_dimension_numbers<[1], [0], [0], [1], [0, 0, 1, 1], [], []>} : vector<64x128xbf16>, vector<128x128xbf16>, vector<64x128xf32> -> vector<64x128xf32>
    %29 = arith.addf %28, %16 : vector<64x128xf32>
    %cst_18 = arith.constant 0.000000e+00 : f32
    %30 = vector.broadcast %cst_18 : f32 to vector<64x128xf32>
    %31 = arith.maximumf %29, %30 : vector<64x128xf32>
    %cst_19 = arith.constant 1.000000e-01 : f32
    %32 = vector.broadcast %cst_19 : f32 to vector<64x128xf32>
    %33 = arith.mulf %32, %31 : vector<64x128xf32>
    %cst_20 = arith.constant 0.899999976 : f32
    %34 = vector.broadcast %cst_20 : f32 to vector<64x128xf32>
    %35 = arith.mulf %34, %26 : vector<64x128xf32>
    %36 = arith.addf %33, %35 : vector<64x128xf32>
    %c2_i32 = arith.constant 2 : i32
    %37 = arith.truncf %36 : vector<64x128xf32> to vector<64x128xbf16>
    %cst_21 = arith.constant dense<0.000000e+00> : vector<64x128xf32>
    %38 = tpu.matmul %37, %3, %cst_21 {dimension_numbers = #tpu.dot_dimension_numbers<[1], [0], [0], [1], [0, 0, 1, 1], [], []>} : vector<64x128xbf16>, vector<128x128xbf16>, vector<64x128xf32> -> vector<64x128xf32>
    %39 = arith.addf %38, %16 : vector<64x128xf32>
    %cst_22 = arith.constant 0.000000e+00 : f32
    %40 = vector.broadcast %cst_22 : f32 to vector<64x128xf32>
    %41 = arith.maximumf %39, %40 : vector<64x128xf32>
    %cst_23 = arith.constant 1.000000e-01 : f32
    %42 = vector.broadcast %cst_23 : f32 to vector<64x128xf32>
    %43 = arith.mulf %42, %41 : vector<64x128xf32>
    %cst_24 = arith.constant 0.899999976 : f32
    %44 = vector.broadcast %cst_24 : f32 to vector<64x128xf32>
    %45 = arith.mulf %44, %36 : vector<64x128xf32>
    %46 = arith.addf %43, %45 : vector<64x128xf32>
    %c3_i32 = arith.constant 3 : i32
    %47 = arith.truncf %46 : vector<64x128xf32> to vector<64x128xbf16>
    %cst_25 = arith.constant dense<0.000000e+00> : vector<64x128xf32>
    %48 = tpu.matmul %47, %3, %cst_25 {dimension_numbers = #tpu.dot_dimension_numbers<[1], [0], [0], [1], [0, 0, 1, 1], [], []>} : vector<64x128xbf16>, vector<128x128xbf16>, vector<64x128xf32> -> vector<64x128xf32>
    %49 = arith.addf %48, %16 : vector<64x128xf32>
    %cst_26 = arith.constant 0.000000e+00 : f32
    %50 = vector.broadcast %cst_26 : f32 to vector<64x128xf32>
    %51 = arith.maximumf %49, %50 : vector<64x128xf32>
    %cst_27 = arith.constant 1.000000e-01 : f32
    %52 = vector.broadcast %cst_27 : f32 to vector<64x128xf32>
    %53 = arith.mulf %52, %51 : vector<64x128xf32>
    %cst_28 = arith.constant 0.899999976 : f32
    %54 = vector.broadcast %cst_28 : f32 to vector<64x128xf32>
    %55 = arith.mulf %54, %46 : vector<64x128xf32>
    %56 = arith.addf %53, %55 : vector<64x128xf32>
    %c4_i32 = arith.constant 4 : i32
    %57 = arith.truncf %56 : vector<64x128xf32> to vector<64x128xbf16>
    %cst_29 = arith.constant dense<0.000000e+00> : vector<64x128xf32>
    %58 = tpu.matmul %57, %3, %cst_29 {dimension_numbers = #tpu.dot_dimension_numbers<[1], [0], [0], [1], [0, 0, 1, 1], [], []>} : vector<64x128xbf16>, vector<128x128xbf16>, vector<64x128xf32> -> vector<64x128xf32>
    %59 = arith.addf %58, %16 : vector<64x128xf32>
    %cst_30 = arith.constant 0.000000e+00 : f32
    %60 = vector.broadcast %cst_30 : f32 to vector<64x128xf32>
    %61 = arith.maximumf %59, %60 : vector<64x128xf32>
    %cst_31 = arith.constant 1.000000e-01 : f32
    %62 = vector.broadcast %cst_31 : f32 to vector<64x128xf32>
    %63 = arith.mulf %62, %61 : vector<64x128xf32>
    %cst_32 = arith.constant 0.899999976 : f32
    %64 = vector.broadcast %cst_32 : f32 to vector<64x128xf32>
    %65 = arith.mulf %64, %56 : vector<64x128xf32>
    %66 = arith.addf %63, %65 : vector<64x128xf32>
    %c5_i32 = arith.constant 5 : i32
    %67 = arith.truncf %66 : vector<64x128xf32> to vector<64x128xbf16>
    %cst_33 = arith.constant dense<0.000000e+00> : vector<64x128xf32>
    %68 = tpu.matmul %67, %3, %cst_33 {dimension_numbers = #tpu.dot_dimension_numbers<[1], [0], [0], [1], [0, 0, 1, 1], [], []>} : vector<64x128xbf16>, vector<128x128xbf16>, vector<64x128xf32> -> vector<64x128xf32>
    %69 = arith.addf %68, %16 : vector<64x128xf32>
    %cst_34 = arith.constant 0.000000e+00 : f32
    %70 = vector.broadcast %cst_34 : f32 to vector<64x128xf32>
    %71 = arith.maximumf %69, %70 : vector<64x128xf32>
    %cst_35 = arith.constant 1.000000e-01 : f32
    %72 = vector.broadcast %cst_35 : f32 to vector<64x128xf32>
    %73 = arith.mulf %72, %71 : vector<64x128xf32>
    %cst_36 = arith.constant 0.899999976 : f32
    %74 = vector.broadcast %cst_36 : f32 to vector<64x128xf32>
    %75 = arith.mulf %74, %66 : vector<64x128xf32>
    %76 = arith.addf %73, %75 : vector<64x128xf32>
    %c6_i32 = arith.constant 6 : i32
    %77 = arith.truncf %76 : vector<64x128xf32> to vector<64x128xbf16>
    %cst_37 = arith.constant dense<0.000000e+00> : vector<64x128xf32>
    %78 = tpu.matmul %77, %3, %cst_37 {dimension_numbers = #tpu.dot_dimension_numbers<[1], [0], [0], [1], [0, 0, 1, 1], [], []>} : vector<64x128xbf16>, vector<128x128xbf16>, vector<64x128xf32> -> vector<64x128xf32>
    %79 = arith.addf %78, %16 : vector<64x128xf32>
    %cst_38 = arith.constant 0.000000e+00 : f32
    %80 = vector.broadcast %cst_38 : f32 to vector<64x128xf32>
    %81 = arith.maximumf %79, %80 : vector<64x128xf32>
    %cst_39 = arith.constant 1.000000e-01 : f32
    %82 = vector.broadcast %cst_39 : f32 to vector<64x128xf32>
    %83 = arith.mulf %82, %81 : vector<64x128xf32>
    %cst_40 = arith.constant 0.899999976 : f32
    %84 = vector.broadcast %cst_40 : f32 to vector<64x128xf32>
    %85 = arith.mulf %84, %76 : vector<64x128xf32>
    %86 = arith.addf %83, %85 : vector<64x128xf32>
    %c7_i32 = arith.constant 7 : i32
    %87 = arith.truncf %86 : vector<64x128xf32> to vector<64x128xbf16>
    %cst_41 = arith.constant dense<0.000000e+00> : vector<64x128xf32>
    %88 = tpu.matmul %87, %3, %cst_41 {dimension_numbers = #tpu.dot_dimension_numbers<[1], [0], [0], [1], [0, 0, 1, 1], [], []>} : vector<64x128xbf16>, vector<128x128xbf16>, vector<64x128xf32> -> vector<64x128xf32>
    %89 = arith.addf %88, %16 : vector<64x128xf32>
    %cst_42 = arith.constant 0.000000e+00 : f32
    %90 = vector.broadcast %cst_42 : f32 to vector<64x128xf32>
    %91 = arith.maximumf %89, %90 : vector<64x128xf32>
    %cst_43 = arith.constant 1.000000e-01 : f32
    %92 = vector.broadcast %cst_43 : f32 to vector<64x128xf32>
    %93 = arith.mulf %92, %91 : vector<64x128xf32>
    %cst_44 = arith.constant 0.899999976 : f32
    %94 = vector.broadcast %cst_44 : f32 to vector<64x128xf32>
    %95 = arith.mulf %94, %86 : vector<64x128xf32>
    %96 = arith.addf %93, %95 : vector<64x128xf32>
    %c8_i32 = arith.constant 8 : i32
    %97 = arith.truncf %96 : vector<64x128xf32> to vector<64x128xbf16>
    %cst_45 = arith.constant dense<0.000000e+00> : vector<64x128xf32>
    %98 = tpu.matmul %97, %3, %cst_45 {dimension_numbers = #tpu.dot_dimension_numbers<[1], [0], [0], [1], [0, 0, 1, 1], [], []>} : vector<64x128xbf16>, vector<128x128xbf16>, vector<64x128xf32> -> vector<64x128xf32>
    %99 = arith.addf %98, %16 : vector<64x128xf32>
    %cst_46 = arith.constant 0.000000e+00 : f32
    %100 = vector.broadcast %cst_46 : f32 to vector<64x128xf32>
    %101 = arith.maximumf %99, %100 : vector<64x128xf32>
    %cst_47 = arith.constant 1.000000e-01 : f32
    %102 = vector.broadcast %cst_47 : f32 to vector<64x128xf32>
    %103 = arith.mulf %102, %101 : vector<64x128xf32>
    %cst_48 = arith.constant 0.899999976 : f32
    %104 = vector.broadcast %cst_48 : f32 to vector<64x128xf32>
    %105 = arith.mulf %104, %96 : vector<64x128xf32>
    %106 = arith.addf %103, %105 : vector<64x128xf32>
    %c9_i32 = arith.constant 9 : i32
    %107 = arith.truncf %106 : vector<64x128xf32> to vector<64x128xbf16>
    %cst_49 = arith.constant dense<0.000000e+00> : vector<64x128xf32>
    %108 = tpu.matmul %107, %3, %cst_49 {dimension_numbers = #tpu.dot_dimension_numbers<[1], [0], [0], [1], [0, 0, 1, 1], [], []>} : vector<64x128xbf16>, vector<128x128xbf16>, vector<64x128xf32> -> vector<64x128xf32>
    %109 = arith.addf %108, %16 : vector<64x128xf32>
    %cst_50 = arith.constant 0.000000e+00 : f32
    %110 = vector.broadcast %cst_50 : f32 to vector<64x128xf32>
    %111 = arith.maximumf %109, %110 : vector<64x128xf32>
    %cst_51 = arith.constant 1.000000e-01 : f32
    %112 = vector.broadcast %cst_51 : f32 to vector<64x128xf32>
    %113 = arith.mulf %112, %111 : vector<64x128xf32>
    %cst_52 = arith.constant 0.899999976 : f32
    %114 = vector.broadcast %cst_52 : f32 to vector<64x128xf32>
    %115 = arith.mulf %114, %106 : vector<64x128xf32>
    %116 = arith.addf %113, %115 : vector<64x128xf32>
    %117 = arith.truncf %116 : vector<64x128xf32> to vector<64x128xbf16>
    %cst_53 = arith.constant dense<0.000000e+00> : vector<64x128xf32>
    %118 = tpu.matmul %117, %4, %cst_53 {dimension_numbers = #tpu.dot_dimension_numbers<[1], [0], [0], [1], [0, 0, 1, 1], [], []>} : vector<64x128xbf16>, vector<128x128xbf16>, vector<64x128xf32> -> vector<64x128xf32>
    %119 = arith.truncf %118 : vector<64x128xf32> to vector<64x128xbf16>
    %cst_54 = arith.constant dense<0.000000e+00> : vector<64x128xf32>
    %120 = tpu.matmul %0, %119, %cst_54 {dimension_numbers = #tpu.dot_dimension_numbers<[1], [0], [0], [1], [0, 0, 1, 1], [], []>} : vector<64x64xbf16>, vector<64x128xbf16>, vector<64x128xf32> -> vector<64x128xf32>
    %121 = vector.broadcast %7 : vector<1x128xf32> to vector<64x128xf32>
    %122 = arith.addf %120, %121 : vector<64x128xf32>
    %123 = tpu.iota {dimensions = array<i32: 1>} : vector<64x128xi32>
    %c8_i32_55 = arith.constant 8 : i32
    %124 = vector.broadcast %c8_i32_55 : i32 to vector<64x128xi32>
    %125 = arith.cmpi slt, %123, %124 : vector<64x128xi32>
    %cst_56 = arith.constant -1.000000e+30 : f32
    %126 = vector.broadcast %cst_56 : f32 to vector<64x128xf32>
    %127 = arith.select %125, %122, %126 : vector<64x128xi1>, vector<64x128xf32>
    %cst_57 = arith.constant dense<0xFF800000> : vector<64xf32>
    %128 = vector.multi_reduction <maximumf>, %127, %cst_57 [1] : vector<64x128xf32> to vector<64xf32>
    %129 = vector.shape_cast %128 : vector<64xf32> to vector<64x1xf32>
    %130 = vector.broadcast %129 : vector<64x1xf32> to vector<64x128xf32>
    %131 = arith.subf %127, %130 : vector<64x128xf32>
    %132 = math.exp %131 : vector<64x128xf32>
    %cst_58 = arith.constant dense<0.000000e+00> : vector<64xf32>
    %133 = vector.multi_reduction <add>, %132, %cst_58 [1] : vector<64x128xf32> to vector<64xf32>
    %134 = vector.shape_cast %133 : vector<64xf32> to vector<64x1xf32>
    %135 = math.log %134 : vector<64x1xf32>
    %136 = vector.broadcast %135 : vector<64x1xf32> to vector<64x128xf32>
    %137 = arith.subf %131, %136 : vector<64x128xf32>
    %c0_59 = arith.constant 0 : index
    %c0_60 = arith.constant 0 : index
    %138 = vector.load %arg4[%c0_59, %c0_60] : memref<64x128xf32, #tpu.memory_space<vmem>>, vector<64x128xf32>
    tpu.vector_store %arg4[%c0_59, %c0_60], %137 {strides = array<i32>} : memref<64x128xf32, #tpu.memory_space<vmem>>, vector<64x128xf32>,
    return
  }
}

</mosaic_0001>

<llo_original>
// kernel: tpu_custom_call.1
$region0: #{tpu_custom_call.1}
  #allocation0 [shape = 'u32[]', space=smem, size = 0x4, offset = 0x4, fixed_abs, tag = 'smem constant byte address 0x4 - core index']
  #allocation1 [shape = 'u32[144,128]{1,0:T(1,128)}', space=vmem, size = 0x12000, scoped, tag = 'internal scratch']
  %s0 = inlined_call_operand.vmem [shape: bf16[64,64], index: 0, kind: input, shape index: {}]
  %s1 = inlined_call_operand.vmem [shape: bf16[64,32], index: 1, kind: input, shape index: {}]
  %s2 = inlined_call_operand.hbm [shape: bf16[288,128], index: 2, kind: input, shape index: {}]
  %s3 = inlined_call_operand.vmem [shape: f32[24,128], index: 3, kind: input, shape index: {}]
  %s4 = inlined_call_operand.hbm [shape: f32[64,128], index: 4, kind: output, shape index: {}]
  %s5 = sld [smem:[#allocation0]]
  $region30: #{tpu_custom_call.1} parent=0
    _
  %s7 = ssub.s32 1, %s5
  %s8 = scalar_select 0, %s7, %s5
  $region1: #{tpu_custom_call.1} parent=0
    #allocation2 [shape = 'u8[73728]{0}', space=vmem, size = 0x12000, scoped, tag = 'input window, operand 2, single buffered']
    #allocation3 [shape = 's32[1]{0}', space=sflag, size = 0x4, scoped, tag = 'scoped memory for tpu_custom_call.1']
    #allocation4 [shape = 's32[1]{0}', space=sflag, size = 0x4, scoped, tag = 'scoped memory for tpu_custom_call.1']
    #allocation5 [shape = 'u8[32768]{0}', space=vmem, size = 0x8000, scoped, tag = 'output window, operand 0, single buffered']
    %9 = vsyncpa [#allocation3], 0
    %10 = vsyncpa [#allocation4], 0
    // Predicated region
    $region2: #{tpu_custom_call.1} parent=1 // pred_check
      _
    $region3: #{tpu_custom_call.1} parent=1 // pred_check_branch
      %12 = sbr.rel (0) target = $region5
    $region4: #{tpu_custom_call.1} parent=1 // pred_region
      _
    $region5: #{tpu_custom_call.1} parent=1 // pred_fallthru
      _
    // Predicated region
    $region6: #{tpu_custom_call.1} parent=1 // pred_check
      _
    $region7: #{tpu_custom_call.1} parent=1 // pred_check_branch
      %14 = sbr.rel (0) target = $region9
    $region8: #{tpu_custom_call.1} parent=1 // pred_region
      _
    $region9: #{tpu_custom_call.1} parent=1 // pred_fallthru
      _
    // Predicated region
    $region10: #{tpu_custom_call.1} parent=1 // pred_check
      _
    $region11: #{tpu_custom_call.1} parent=1 // pred_check_branch
      %16 = sbr.rel (0) target = $region13
    $region12: #{tpu_custom_call.1} parent=1 // pred_region
      %s18 = ssub.s32 2304, 2304
      %19 = vsyncadd [#allocation3], %s18
      %s20 = sshll.u32 [#allocation2], 4
      %s21 = int_to_ptr.vmem [resolvable:$true] %s20
      %26 = dma.hbm_to_vmem [thread:$0]  %s2, 2304, %s21, [#allocation3], 64, 64, 4
    $region13: #{tpu_custom_call.1} parent=1 // pred_fallthru
      _
    // Predicated region
    $region14: #{tpu_custom_call.1} parent=1 // pred_check
      _
    $region15: #{tpu_custom_call.1} parent=1 // pred_check_branch
      %28 = sbr.rel (0) target = $region17
    $region16: #{tpu_custom_call.1} parent=1 // pred_region
      _
    $region17: #{tpu_custom_call.1} parent=1 // pred_fallthru
      _
    // Predicated region
    $region18: #{tpu_custom_call.1} parent=1 // pred_check
      _
    $region19: #{tpu_custom_call.1} parent=1 // pred_check_branch
      %30 = sbr.rel (0) target = $region21
    $region20: #{tpu_custom_call.1} parent=1 // pred_region
      %31 = dma.done [#allocation3], 2304
    $region21: #{tpu_custom_call.1} parent=1 // pred_fallthru
      _
    %v33 = vld [vmem:[%s0] sm:$0xf]
    %v34 = vld [vmem:[%s0 + $0x4] sm:$0xf]
    %v35 = vld [vmem:[%s0 + $0x8] sm:$0xf]
    %v36 = vld [vmem:[%s0 + $0xc] sm:$0xf]
    %v37 = vld [vmem:[%s0 + $0x10] sm:$0xf]
    %v38 = vld [vmem:[%s0 + $0x14] sm:$0xf]
    %v39 = vld [vmem:[%s0 + $0x18] sm:$0xf]
    %v40 = vld [vmem:[%s0 + $0x1c] sm:$0xf]
    %v41 = vld [vmem:[%s1] sm:$0xf]
    %v42 = vld [vmem:[%s1 + $0x4] sm:$0xf]
    %v43 = vld [vmem:[%s1 + $0x8] sm:$0xf]
    %v44 = vld [vmem:[%s1 + $0xc] sm:$0xf]
    %v45 = vld [vmem:[%s1 + $0x10] sm:$0xf]
    %v46 = vld [vmem:[%s1 + $0x14] sm:$0xf]
    %v47 = vld [vmem:[%s1 + $0x18] sm:$0xf]
    %v48 = vld [vmem:[%s1 + $0x1c] sm:$0xf]
    %v49 = vld [vmem:[#allocation2] sm:$0xf]
    %v50 = vld [vmem:[#allocation2 + $0x4] sm:$0xf]
    %v51 = vld [vmem:[#allocation2 + $0x8] sm:$0xf]
    %v52 = vld [vmem:[#allocation2 + $0xc] sm:$0xf]
    %v53 = vld [vmem:[#allocation2 + $0x10] sm:$0xf]
    %v54 = vld [vmem:[#allocation2 + $0x14] sm:$0xf]
    %v55 = vld [vmem:[#allocation2 + $0x18] sm:$0xf]
    %v56 = vld [vmem:[#allocation2 + $0x1c] sm:$0xf]
    %v57 = vld [vmem:[#allocation2 + $0x20] sm:$0xf]
    %v58 = vld [vmem:[#allocation2 + $0x24] sm:$0xf]
    %v59 = vld [vmem:[#allocation2 + $0x28] sm:$0xf]
    %v60 = vld [vmem:[#allocation2 + $0x2c] sm:$0xf]
    %v61 = vld [vmem:[#allocation2 + $0x30] sm:$0xf]
    %v62 = vld [vmem:[#allocation2 + $0x34] sm:$0xf]
    %v63 = vld [vmem:[#allocation2 + $0x38] sm:$0xf]
    %v64 = vld [vmem:[#allocation2 + $0x3c] sm:$0xf]
    %v65 = vld [vmem:[#allocation2 + $0x40] sm:$0xf]
    %v66 = vld [vmem:[#allocation2 + $0x44] sm:$0xf]
    %v67 = vld [vmem:[#allocation2 + $0x48] sm:$0xf]
    %v68 = vld [vmem:[#allocation2 + $0x4c] sm:$0xf]
    %v69 = vld [vmem:[#allocation2 + $0x50] sm:$0xf]
    %v70 = vld [vmem:[#allocation2 + $0x54] sm:$0xf]
    %v71 = vld [vmem:[#allocation2 + $0x58] sm:$0xf]
    %v72 = vld [vmem:[#allocation2 + $0x5c] sm:$0xf]
    %v73 = vld [vmem:[#allocation2 + $0x60] sm:$0xf]
    %v74 = vld [vmem:[#allocation2 + $0x64] sm:$0xf]
    %v75 = vld [vmem:[#allocation2 + $0x68] sm:$0xf]
    %v76 = vld [vmem:[#allocation2 + $0x6c] sm:$0xf]
    %v77 = vld [vmem:[#allocation2 + $0x70] sm:$0xf]
    %v78 = vld [vmem:[#allocation2 + $0x74] sm:$0xf]
    %v79 = vld [vmem:[#allocation2 + $0x78] sm:$0xf]
    %v80 = vld [vmem:[#allocation2 + $0x7c] sm:$0xf]
    %v81 = vld [vmem:[#allocation2 + $0x80] sm:$0xf]
    %v82 = vld [vmem:[#allocation2 + $0x84] sm:$0xf]
    %v83 = vld [vmem:[#allocation2 + $0x88] sm:$0xf]
    %v84 = vld [vmem:[#allocation2 + $0x8c] sm:$0xf]
    %v85 = vld [vmem:[%s3] sm:$0x1]
    %v86 = vld [vmem:[%s3 + $0x8] sm:$0x1]
    %v87 = vld [vmem:[%s3 + $0x10] sm:$0x1]
    %v96 = vunpack.c.l.b16 %v41
    %v97 = vunpack.c.l.b16 %v42
    %v98 = vunpack.c.l.b16 %v43
    %v99 = vunpack.c.l.b16 %v44
    %v100 = vunpack.c.l.b16 %v45
    %v101 = vunpack.c.l.b16 %v46
    %v102 = vunpack.c.l.b16 %v47
    %v103 = vunpack.c.l.b16 %v48
    %v104 = vpack.c.b16 %v97, %v96
    %v105 = vpack.c.b16 %v99, %v98
    %v106 = vpack.c.b16 %v101, %v100
    %v107 = vpack.c.b16 %v103, %v102
    %v112 = vunpack.c.l.b16 %v49
    %v113 = vunpack.c.l.b16 %v50
    %v114 = vunpack.c.l.b16 %v51
    %v115 = vunpack.c.l.b16 %v52
    %v116 = vpack.c.b16 %v113, %v112
    %v117 = vpack.c.b16 %v115, %v114
    %vm120 = vcmask 261120
    %v122 = vsel %vm120, %v104, 0
    %v125 = vsel %vm120, %v105, 0
    %v128 = vsel %vm120, %v106, 0
    %v131 = vsel %vm120, %v107, 0
    %133 = vmatprep.subr.bf16.mxu0 0
    %134 = vmatpush1.bf16.msra.mxu0 %v116
    %135 = vmatprep.subr.bf16.mxu0 0
    %136 = vmatpush1.bf16.msra.mxu0 %v117
    %137 = vmatprep.subr.bf16.mxu0 0
    %138 = vmatpush1.bf16.msra.mxu0 0
    %139 = vmatprep.subr.bf16.mxu0 0
    %140 = vmatpush1.bf16.msra.mxu0 0
    %141 = vmatprep.subr.bf16.mxu0 0
    %142 = vmatpush1.bf16.msra.mxu0 0
    %143 = vmatprep.subr.bf16.mxu0 0
    %144 = vmatpush1.bf16.msra.mxu0 0
    %145 = vmatprep.subr.bf16.mxu0 0
    %146 = vmatpush1.bf16.msra.mxu0 0
    %147 = vmatprep.subr.bf16.mxu0 0
    %148 = vmatpush1.bf16.msra.mxu0 0
    %149 = vmatprep.subr.bf16.mxu0 0
    %150 = vmatpush1.bf16.msra.mxu0 0
    %151 = vmatprep.subr.bf16.mxu0 0
    %152 = vmatpush1.bf16.msra.mxu0 0
    %153 = vmatprep.subr.bf16.mxu0 0
    %154 = vmatpush1.bf16.msra.mxu0 0
    %155 = vmatprep.subr.bf16.mxu0 0
    %156 = vmatpush1.bf16.msra.mxu0 0
    %157 = vmatprep.subr.bf16.mxu0 0
    %158 = vmatpush1.bf16.msra.mxu0 0
    %159 = vmatprep.subr.bf16.mxu0 0
    %160 = vmatpush1.bf16.msra.mxu0 0
    %161 = vmatprep.subr.bf16.mxu0 0
    %162 = vmatpush1.bf16.msra.mxu0 0
    %163 = vmatprep.subr.bf16.mxu0 0
    %164 = vmatpush1.bf16.msra.mxu0 0
    %165 = vmatprep.mubr.bf16.mxu0 0
    %166 = vmatmul.mubr.bf16.gmra.mrb[0].mxu0 %v122
    %v167 = vpop.f32.mrb[0].mxu0
    %v168 = vadd.f32 0.0, %v167
    %v169 = vpop.f32.mrb[0].mxu0
    %v170 = vpop.f32.mrb[0].mxu0
    %v171 = vadd.f32 0.0, %v170
    %v172 = vpop.f32.mrb[0].mxu0
    %173 = vmatprep.mubr.bf16.mxu0 0
    %174 = vmatmul.mubr.bf16.gmra.mrb[0].mxu0 %v125
    %v175 = vpop.f32.mrb[0].mxu0
    %v176 = vadd.f32 0.0, %v175
    %v177 = vpop.f32.mrb[0].mxu0
    %v178 = vpop.f32.mrb[0].mxu0
    %v179 = vadd.f32 0.0, %v178
    %v180 = vpop.f32.mrb[0].mxu0
    %181 = vmatprep.mubr.bf16.mxu0 0
    %182 = vmatmul.mubr.bf16.gmra.mrb[0].mxu0 %v128
    %v183 = vpop.f32.mrb[0].mxu0
    %v184 = vadd.f32 0.0, %v183
    %v185 = vpop.f32.mrb[0].mxu0
    %v186 = vpop.f32.mrb[0].mxu0
    %v187 = vadd.f32 0.0, %v186
    %v188 = vpop.f32.mrb[0].mxu0
    %189 = vmatprep.mubr.bf16.mxu0 0
    %190 = vmatmul.mubr.bf16.gmra.mrb[0].mxu0 %v131
    %v191 = vpop.f32.mrb[0].mxu0
    %v192 = vadd.f32 0.0, %v191
    %v193 = vpop.f32.mrb[0].mxu0
    %v194 = vpop.f32.mrb[0].mxu0
    %v195 = vadd.f32 0.0, %v194
    %v196 = vpop.f32.mrb[0].mxu0
    %197 = vdwg.mxu0
    %v198 = vpack.c.bf16 %v171, %v168
    %v199 = vpack.c.bf16 %v179, %v176
    %v200 = vpack.c.bf16 %v187, %v184
    %v201 = vpack.c.bf16 %v195, %v192
    %v202 = vlaneseq
    %v203 = vshrl.u32 %v202, 7
    %v204 = vsub.s32 0, %v203
    %v205 = vrot.slane %v85, %v204
    %v214 = vunpack.c.l.b16 %v33
    %v215 = vunpack.c.l.b16 %v34
    %v216 = vunpack.c.l.b16 %v35
    %v217 = vunpack.c.l.b16 %v36
    %v218 = vunpack.c.l.b16 %v37
    %v219 = vunpack.c.l.b16 %v38
    %v220 = vunpack.c.l.b16 %v39
    %v221 = vunpack.c.l.b16 %v40
    %v222 = vpack.c.b16 %v215, %v214
    %v223 = vpack.c.b16 %v217, %v216
    %v224 = vpack.c.b16 %v219, %v218
    %v225 = vpack.c.b16 %v221, %v220
    %vm226 = vcmask 523264
    %v228 = vsel %vm226, %v222, 0
    %v231 = vsel %vm226, %v223, 0
    %v234 = vsel %vm226, %v224, 0
    %v237 = vsel %vm226, %v225, 0
    %239 = vmatprep.subr.bf16.mxu0 0
    %240 = vmatpush1.bf16.msra.mxu0 %v198
    %241 = vmatprep.subr.bf16.mxu0 0
    %242 = vmatpush1.bf16.msra.mxu0 %v199
    %243 = vmatprep.subr.bf16.mxu0 0
    %244 = vmatpush1.bf16.msra.mxu0 %v200
    %245 = vmatprep.subr.bf16.mxu0 0
    %246 = vmatpush1.bf16.msra.mxu0 %v201
    %247 = vmatprep.subr.bf16.mxu0 0
    %248 = vmatpush1.bf16.msra.mxu0 0
    %249 = vmatprep.subr.bf16.mxu0 0
    %250 = vmatpush1.bf16.msra.mxu0 0
    %251 = vmatprep.subr.bf16.mxu0 0
    %252 = vmatpush1.bf16.msra.mxu0 0
    %253 = vmatprep.subr.bf16.mxu0 0
    %254 = vmatpush1.bf16.msra.mxu0 0
    %255 = vmatprep.subr.bf16.mxu0 0
    %256 = vmatpush1.bf16.msra.mxu0 0
    %257 = vmatprep.subr.bf16.mxu0 0
    %258 = vmatpush1.bf16.msra.mxu0 0
    %259 = vmatprep.subr.bf16.mxu0 0
    %260 = vmatpush1.bf16.msra.mxu0 0
    %261 = vmatprep.subr.bf16.mxu0 0
    %262 = vmatpush1.bf16.msra.mxu0 0
    %263 = vmatprep.subr.bf16.mxu0 0
    %264 = vmatpush1.bf16.msra.mxu0 0
    %265 = vmatprep.subr.bf16.mxu0 0
    %266 = vmatpush1.bf16.msra.mxu0 0
    %267 = vmatprep.subr.bf16.mxu0 0
    %268 = vmatpush1.bf16.msra.mxu0 0
    %269 = vmatprep.subr.bf16.mxu0 0
    %270 = vmatpush1.bf16.msra.mxu0 0
    %271 = vmatprep.mubr.bf16.mxu0 0
    %272 = vmatmul.mubr.bf16.gmra.mrb[0].mxu0 %v228
    %v273 = vpop.f32.mrb[0].mxu0
    %v274 = vadd.f32 %v205, %v273
    %v275 = vpop.f32.mrb[0].mxu0
    %v276 = vpop.f32.mrb[0].mxu0
    %v277 = vadd.f32 %v205, %v276
    %v278 = vpop.f32.mrb[0].mxu0
    %279 = vmatprep.mubr.bf16.mxu0 0
    %280 = vmatmul.mubr.bf16.gmra.mrb[0].mxu0 %v231
    %v281 = vpop.f32.mrb[0].mxu0
    %v282 = vadd.f32 %v205, %v281
    %v283 = vpop.f32.mrb[0].mxu0
    %v284 = vpop.f32.mrb[0].mxu0
    %v285 = vadd.f32 %v205, %v284
    %v286 = vpop.f32.mrb[0].mxu0
    %287 = vmatprep.mubr.bf16.mxu0 0
    %288 = vmatmul.mubr.bf16.gmra.mrb[0].mxu0 %v234
    %v289 = vpop.f32.mrb[0].mxu0
    %v290 = vadd.f32 %v205, %v289
    %v291 = vpop.f32.mrb[0].mxu0
    %v292 = vpop.f32.mrb[0].mxu0
    %v293 = vadd.f32 %v205, %v292
    %v294 = vpop.f32.mrb[0].mxu0
    %295 = vmatprep.mubr.bf16.mxu0 0
    %296 = vmatmul.mubr.bf16.gmra.mrb[0].mxu0 %v237
    %v297 = vpop.f32.mrb[0].mxu0
    %v298 = vadd.f32 %v205, %v297
    %v299 = vpop.f32.mrb[0].mxu0
    %v300 = vpop.f32.mrb[0].mxu0
    %v301 = vadd.f32 %v205, %v300
    %v302 = vpop.f32.mrb[0].mxu0
    %303 = vdwg.mxu0
    %v304 = vmax.f32 %v274, 0.0
    %v305 = vmax.f32 %v277, 0.0
    %v306 = vmax.f32 %v282, 0.0
    %v307 = vmax.f32 %v285, 0.0
    %v308 = vmax.f32 %v290, 0.0
    %v309 = vmax.f32 %v293, 0.0
    %v310 = vmax.f32 %v298, 0.0
    %v311 = vmax.f32 %v301, 0.0
    %v312 = vlaneseq
    %v313 = vshrl.u32 %v312, 7
    %v314 = vsub.s32 0, %v313
    %v315 = vrot.slane %v86, %v314
    %v316 = vpack.c.bf16 %v305, %v304
    %v317 = vpack.c.bf16 %v307, %v306
    %v318 = vpack.c.bf16 %v309, %v308
    %v319 = vpack.c.bf16 %v311, %v310
    %v336 = vunpack.c.l.b16 %v53
    %v337 = vunpack.c.l.b16 %v54
    %v338 = vunpack.c.l.b16 %v55
    %v339 = vunpack.c.l.b16 %v56
    %v340 = vunpack.c.l.b16 %v57
    %v341 = vunpack.c.l.b16 %v58
    %v342 = vunpack.c.l.b16 %v59
    %v343 = vunpack.c.l.b16 %v60
    %v344 = vunpack.c.l.b16 %v61
    %v345 = vunpack.c.l.b16 %v62
    %v346 = vunpack.c.l.b16 %v63
    %v347 = vunpack.c.l.b16 %v64
    %v348 = vunpack.c.l.b16 %v65
    %v349 = vunpack.c.l.b16 %v66
    %v350 = vunpack.c.l.b16 %v67
    %v351 = vunpack.c.l.b16 %v68
    %v352 = vpack.c.b16 %v337, %v336
    %v353 = vpack.c.b16 %v339, %v338
    %v354 = vpack.c.b16 %v341, %v340
    %v355 = vpack.c.b16 %v343, %v342
    %v356 = vpack.c.b16 %v345, %v344
    %v357 = vpack.c.b16 %v347, %v346
    %v358 = vpack.c.b16 %v349, %v348
    %v359 = vpack.c.b16 %v351, %v350
    %368 = vmatprep.subr.bf16.mxu0 0
    %369 = vmatpush1.bf16.msra.mxu0 %v352
    %370 = vmatprep.subr.bf16.mxu0 0
    %371 = vmatpush1.bf16.msra.mxu0 %v353
    %372 = vmatprep.subr.bf16.mxu0 0
    %373 = vmatpush1.bf16.msra.mxu0 %v354
    %374 = vmatprep.subr.bf16.mxu0 0
    %375 = vmatpush1.bf16.msra.mxu0 %v355
    %376 = vmatprep.subr.bf16.mxu0 0
    %377 = vmatpush1.bf16.msra.mxu0 %v356
    %378 = vmatprep.subr.bf16.mxu0 0
    %379 = vmatpush1.bf16.msra.mxu0 %v357
    %380 = vmatprep.subr.bf16.mxu0 0
    %381 = vmatpush1.bf16.msra.mxu0 %v358
    %382 = vmatprep.subr.bf16.mxu0 0
    %383 = vmatpush1.bf16.msra.mxu0 %v359
    %384 = vmatprep.subr.bf16.mxu0 0
    %385 = vmatpush1.bf16.msra.mxu0 0
    %386 = vmatprep.subr.bf16.mxu0 0
    %387 = vmatpush1.bf16.msra.mxu0 0
    %388 = vmatprep.subr.bf16.mxu0 0
    %389 = vmatpush1.bf16.msra.mxu0 0
    %390 = vmatprep.subr.bf16.mxu0 0
    %391 = vmatpush1.bf16.msra.mxu0 0
    %392 = vmatprep.subr.bf16.mxu0 0
    %393 = vmatpush1.bf16.msra.mxu0 0
    %394 = vmatprep.subr.bf16.mxu0 0
    %395 = vmatpush1.bf16.msra.mxu0 0
    %396 = vmatprep.subr.bf16.mxu0 0
    %397 = vmatpush1.bf16.msra.mxu0 0
    %398 = vmatprep.subr.bf16.mxu0 0
    %399 = vmatpush1.bf16.msra.mxu0 0
    %400 = vmatprep.mubr.bf16.mxu0 0
    %401 = vmatmul.mubr.bf16.gmra.mrb[0].mxu0 %v316
    %v402 = vpop.f32.mrb[0].mxu0
    %v403 = vadd.f32 %v315, %v402
    %v404 = vpop.f32.mrb[0].mxu0
    %v405 = vpop.f32.mrb[0].mxu0
    %v406 = vadd.f32 %v315, %v405
    %v407 = vpop.f32.mrb[0].mxu0
    %408 = vmatprep.mubr.bf16.mxu0 0
    %409 = vmatmul.mubr.bf16.gmra.mrb[0].mxu0 %v317
    %v410 = vpop.f32.mrb[0].mxu0
    %v411 = vadd.f32 %v315, %v410
    %v412 = vpop.f32.mrb[0].mxu0
    %v413 = vpop.f32.mrb[0].mxu0
    %v414 = vadd.f32 %v315, %v413
    %v415 = vpop.f32.mrb[0].mxu0
    %416 = vmatprep.mubr.bf16.mxu0 0
    %417 = vmatmul.mubr.bf16.gmra.mrb[0].mxu0 %v318
    %v418 = vpop.f32.mrb[0].mxu0
    %v419 = vadd.f32 %v315, %v418
    %v420 = vpop.f32.mrb[0].mxu0
    %v421 = vpop.f32.mrb[0].mxu0
    %v422 = vadd.f32 %v315, %v421
    %v423 = vpop.f32.mrb[0].mxu0
    %424 = vmatprep.mubr.bf16.mxu0 0
    %425 = vmatmul.mubr.bf16.gmra.mrb[0].mxu0 %v319
    %v426 = vpop.f32.mrb[0].mxu0
    %v427 = vadd.f32 %v315, %v426
    %v428 = vpop.f32.mrb[0].mxu0
    %v429 = vpop.f32.mrb[0].mxu0
    %v430 = vadd.f32 %v315, %v429
    %v431 = vpop.f32.mrb[0].mxu0
    %432 = vdwg.mxu0
    %v433 = vmax.f32 %v403, 0.0
    %v434 = vmax.f32 %v406, 0.0
    %v435 = vmax.f32 %v411, 0.0
    %v436 = vmax.f32 %v414, 0.0
    %v437 = vmax.f32 %v419, 0.0
    %v438 = vmax.f32 %v422, 0.0
    %v439 = vmax.f32 %v427, 0.0
    %v440 = vmax.f32 %v430, 0.0
    %v441 = vmul.f32 %v433, 0.1
    %v442 = vmul.f32 %v434, 0.1
    %v443 = vmul.f32 %v435, 0.1
    %v444 = vmul.f32 %v436, 0.1
    %v445 = vmul.f32 %v437, 0.1
    %v446 = vmul.f32 %v438, 0.1
    %v447 = vmul.f32 %v439, 0.1
    %v448 = vmul.f32 %v440, 0.1
    %v449 = vmul.f32 %v304, 0.9
    %v450 = vmul.f32 %v305, 0.9
    %v451 = vmul.f32 %v306, 0.9
    %v452 = vmul.f32 %v307, 0.9
    %v453 = vmul.f32 %v308, 0.9
    %v454 = vmul.f32 %v309, 0.9
    %v455 = vmul.f32 %v310, 0.9
    %v456 = vmul.f32 %v311, 0.9
    %v457 = vadd.f32 %v441, %v449
    %v458 = vadd.f32 %v442, %v450
    %v459 = vadd.f32 %v443, %v451
    %v460 = vadd.f32 %v444, %v452
    %v461 = vadd.f32 %v445, %v453
    %v462 = vadd.f32 %v446, %v454
    %v463 = vadd.f32 %v447, %v455
    %v464 = vadd.f32 %v448, %v456
    %v465 = vpack.c.bf16 %v458, %v457
    %v466 = vpack.c.bf16 %v460, %v459
    %v467 = vpack.c.bf16 %v462, %v461
    %v468 = vpack.c.bf16 %v464, %v463
    %469 = vmatprep.subr.bf16.mxu0 0
    %470 = vmatpush1.bf16.msra.mxu0 %v352
    %471 = vmatprep.subr.bf16.mxu0 0
    %472 = vmatpush1.bf16.msra.mxu0 %v353
    %473 = vmatprep.subr.bf16.mxu0 0
    %474 = vmatpush1.bf16.msra.mxu0 %v354
    %475 = vmatprep.subr.bf16.mxu0 0
    %476 = vmatpush1.bf16.msra.mxu0 %v355
    %477 = vmatprep.subr.bf16.mxu0 0
    %478 = vmatpush1.bf16.msra.mxu0 %v356
    %479 = vmatprep.subr.bf16.mxu0 0
    %480 = vmatpush1.bf16.msra.mxu0 %v357
    %481 = vmatprep.subr.bf16.mxu0 0
    %482 = vmatpush1.bf16.msra.mxu0 %v358
    %483 = vmatprep.subr.bf16.mxu0 0
    %484 = vmatpush1.bf16.msra.mxu0 %v359
    %485 = vmatprep.subr.bf16.mxu0 0
    %486 = vmatpush1.bf16.msra.mxu0 0
    %487 = vmatprep.subr.bf16.mxu0 0
    %488 = vmatpush1.bf16.msra.mxu0 0
    %489 = vmatprep.subr.bf16.mxu0 0
    %490 = vmatpush1.bf16.msra.mxu0 0
    %491 = vmatprep.subr.bf16.mxu0 0
    %492 = vmatpush1.bf16.msra.mxu0 0
    %493 = vmatprep.subr.bf16.mxu0 0
    %494 = vmatpush1.bf16.msra.mxu0 0
    %495 = vmatprep.subr.bf16.mxu0 0
    %496 = vmatpush1.bf16.msra.mxu0 0
    %497 = vmatprep.subr.bf16.mxu0 0
    %498 = vmatpush1.bf16.msra.mxu0 0
    %499 = vmatprep.subr.bf16.mxu0 0
    %500 = vmatpush1.bf16.msra.mxu0 0
    %501 = vmatprep.mubr.bf16.mxu0 0
    %502 = vmatmul.mubr.bf16.gmra.mrb[0].mxu0 %v465
    %v503 = vpop.f32.mrb[0].mxu0
    %v504 = vadd.f32 %v315, %v503
    %v505 = vpop.f32.mrb[0].mxu0
    %v506 = vpop.f32.mrb[0].mxu0
    %v507 = vadd.f32 %v315, %v506
    %v508 = vpop.f32.mrb[0].mxu0
    %509 = vmatprep.mubr.bf16.mxu0 0
    %510 = vmatmul.mubr.bf16.gmra.mrb[0].mxu0 %v466
    %v511 = vpop.f32.mrb[0].mxu0
    %v512 = vadd.f32 %v315, %v511
    %v513 = vpop.f32.mrb[0].mxu0
    %v514 = vpop.f32.mrb[0].mxu0
    %v515 = vadd.f32 %v315, %v514
    %v516 = vpop.f32.mrb[0].mxu0
    %517 = vmatprep.mubr.bf16.mxu0 0
    %518 = vmatmul.mubr.bf16.gmra.mrb[0].mxu0 %v467
    %v519 = vpop.f32.mrb[0].mxu0
    %v520 = vadd.f32 %v315, %v519
    %v521 = vpop.f32.mrb[0].mxu0
    %v522 = vpop.f32.mrb[0].mxu0
    %v523 = vadd.f32 %v315, %v522
    %v524 = vpop.f32.mrb[0].mxu0
    %525 = vmatprep.mubr.bf16.mxu0 0
    %526 = vmatmul.mubr.bf16.gmra.mrb[0].mxu0 %v468
    %v527 = vpop.f32.mrb[0].mxu0
    %v528 = vadd.f32 %v315, %v527
    %v529 = vpop.f32.mrb[0].mxu0
    %v530 = vpop.f32.mrb[0].mxu0
    %v531 = vadd.f32 %v315, %v530
    %v532 = vpop.f32.mrb[0].mxu0
    %533 = vdwg.mxu0
    %v534 = vmax.f32 %v504, 0.0
    %v535 = vmax.f32 %v507, 0.0
    %v536 = vmax.f32 %v512, 0.0
    %v537 = vmax.f32 %v515, 0.0
    %v538 = vmax.f32 %v520, 0.0
    %v539 = vmax.f32 %v523, 0.0
    %v540 = vmax.f32 %v528, 0.0
    %v541 = vmax.f32 %v531, 0.0
    %v542 = vmul.f32 %v534, 0.1
    %v543 = vmul.f32 %v535, 0.1
    %v544 = vmul.f32 %v536, 0.1
    %v545 = vmul.f32 %v537, 0.1
    %v546 = vmul.f32 %v538, 0.1
    %v547 = vmul.f32 %v539, 0.1
    %v548 = vmul.f32 %v540, 0.1
    %v549 = vmul.f32 %v541, 0.1
    %v550 = vmul.f32 %v457, 0.9
    %v551 = vmul.f32 %v458, 0.9
    %v552 = vmul.f32 %v459, 0.9
    %v553 = vmul.f32 %v460, 0.9
    %v554 = vmul.f32 %v461, 0.9
    %v555 = vmul.f32 %v462, 0.9
    %v556 = vmul.f32 %v463, 0.9
    %v557 = vmul.f32 %v464, 0.9
    %v558 = vadd.f32 %v542, %v550
    %v559 = vadd.f32 %v543, %v551
    %v560 = vadd.f32 %v544, %v552
    %v561 = vadd.f32 %v545, %v553
    %v562 = vadd.f32 %v546, %v554
    %v563 = vadd.f32 %v547, %v555
    %v564 = vadd.f32 %v548, %v556
    %v565 = vadd.f32 %v549, %v557
    %v566 = vpack.c.bf16 %v559, %v558
    %v567 = vpack.c.bf16 %v561, %v560
    %v568 = vpack.c.bf16 %v563, %v562
    %v569 = vpack.c.bf16 %v565, %v564
    %570 = vmatprep.subr.bf16.mxu0 0
    %571 = vmatpush1.bf16.msra.mxu0 %v352
    %572 = vmatprep.subr.bf16.mxu0 0
    %573 = vmatpush1.bf16.msra.mxu0 %v353
    %574 = vmatprep.subr.bf16.mxu0 0
    %575 = vmatpush1.bf16.msra.mxu0 %v354
    %576 = vmatprep.subr.bf16.mxu0 0
    %577 = vmatpush1.bf16.msra.mxu0 %v355
    %578 = vmatprep.subr.bf16.mxu0 0
    %579 = vmatpush1.bf16.msra.mxu0 %v356
    %580 = vmatprep.subr.bf16.mxu0 0
    %581 = vmatpush1.bf16.msra.mxu0 %v357
    %582 = vmatprep.subr.bf16.mxu0 0
    %583 = vmatpush1.bf16.msra.mxu0 %v358
    %584 = vmatprep.subr.bf16.mxu0 0
    %585 = vmatpush1.bf16.msra.mxu0 %v359
    %586 = vmatprep.subr.bf16.mxu0 0
    %587 = vmatpush1.bf16.msra.mxu0 0
    %588 = vmatprep.subr.bf16.mxu0 0
    %589 = vmatpush1.bf16.msra.mxu0 0
    %590 = vmatprep.subr.bf16.mxu0 0
    %591 = vmatpush1.bf16.msra.mxu0 0
    %592 = vmatprep.subr.bf16.mxu0 0
    %593 = vmatpush1.bf16.msra.mxu0 0
    %594 = vmatprep.subr.bf16.mxu0 0
    %595 = vmatpush1.bf16.msra.mxu0 0
    %596 = vmatprep.subr.bf16.mxu0 0
    %597 = vmatpush1.bf16.msra.mxu0 0
    %598 = vmatprep.subr.bf16.mxu0 0
    %599 = vmatpush1.bf16.msra.mxu0 0
    %600 = vmatprep.subr.bf16.mxu0 0
    %601 = vmatpush1.bf16.msra.mxu0 0
    %602 = vmatprep.mubr.bf16.mxu0 0
    %603 = vmatmul.mubr.bf16.gmra.mrb[0].mxu0 %v566
    %v604 = vpop.f32.mrb[0].mxu0
    %v605 = vadd.f32 %v315, %v604
    %v606 = vpop.f32.mrb[0].mxu0
    %v607 = vpop.f32.mrb[0].mxu0
    %v608 = vadd.f32 %v315, %v607
    %v609 = vpop.f32.mrb[0].mxu0
    %610 = vmatprep.mubr.bf16.mxu0 0
    %611 = vmatmul.mubr.bf16.gmra.mrb[0].mxu0 %v567
    %v612 = vpop.f32.mrb[0].mxu0
    %v613 = vadd.f32 %v315, %v612
    %v614 = vpop.f32.mrb[0].mxu0
    %v615 = vpop.f32.mrb[0].mxu0
    %v616 = vadd.f32 %v315, %v615
    %v617 = vpop.f32.mrb[0].mxu0
    %618 = vmatprep.mubr.bf16.mxu0 0
    %619 = vmatmul.mubr.bf16.gmra.mrb[0].mxu0 %v568
    %v620 = vpop.f32.mrb[0].mxu0
    %v621 = vadd.f32 %v315, %v620
    %v622 = vpop.f32.mrb[0].mxu0
    %v623 = vpop.f32.mrb[0].mxu0
    %v624 = vadd.f32 %v315, %v623
    %v625 = vpop.f32.mrb[0].mxu0
    %626 = vmatprep.mubr.bf16.mxu0 0
    %627 = vmatmul.mubr.bf16.gmra.mrb[0].mxu0 %v569
    %v628 = vpop.f32.mrb[0].mxu0
    %v629 = vadd.f32 %v315, %v628
    %v630 = vpop.f32.mrb[0].mxu0
    %v631 = vpop.f32.mrb[0].mxu0
    %v632 = vadd.f32 %v315, %v631
    %v633 = vpop.f32.mrb[0].mxu0
    %634 = vdwg.mxu0
    %v635 = vmax.f32 %v605, 0.0
    %v636 = vmax.f32 %v608, 0.0
    %v637 = vmax.f32 %v613, 0.0
    %v638 = vmax.f32 %v616, 0.0
    %v639 = vmax.f32 %v621, 0.0
    %v640 = vmax.f32 %v624, 0.0
    %v641 = vmax.f32 %v629, 0.0
    %v642 = vmax.f32 %v632, 0.0
    %v643 = vmul.f32 %v635, 0.1
    %v644 = vmul.f32 %v636, 0.1
    %v645 = vmul.f32 %v637, 0.1
    %v646 = vmul.f32 %v638, 0.1
    %v647 = vmul.f32 %v639, 0.1
    %v648 = vmul.f32 %v640, 0.1
    %v649 = vmul.f32 %v641, 0.1
    %v650 = vmul.f32 %v642, 0.1
    %v651 = vmul.f32 %v558, 0.9
    %v652 = vmul.f32 %v559, 0.9
    %v653 = vmul.f32 %v560, 0.9
    %v654 = vmul.f32 %v561, 0.9
    %v655 = vmul.f32 %v562, 0.9
    %v656 = vmul.f32 %v563, 0.9
    %v657 = vmul.f32 %v564, 0.9
    %v658 = vmul.f32 %v565, 0.9
    %v659 = vadd.f32 %v643, %v651
    %v660 = vadd.f32 %v644, %v652
    %v661 = vadd.f32 %v645, %v653
    %v662 = vadd.f32 %v646, %v654
    %v663 = vadd.f32 %v647, %v655
    %v664 = vadd.f32 %v648, %v656
    %v665 = vadd.f32 %v649, %v657
    %v666 = vadd.f32 %v650, %v658
    %v667 = vpack.c.bf16 %v660, %v659
    %v668 = vpack.c.bf16 %v662, %v661
    %v669 = vpack.c.bf16 %v664, %v663
    %v670 = vpack.c.bf16 %v666, %v665
    %671 = vmatprep.subr.bf16.mxu0 0
    %672 = vmatpush1.bf16.msra.mxu0 %v352
    %673 = vmatprep.subr.bf16.mxu0 0
    %674 = vmatpush1.bf16.msra.mxu0 %v353
    %675 = vmatprep.subr.bf16.mxu0 0
    %676 = vmatpush1.bf16.msra.mxu0 %v354
    %677 = vmatprep.subr.bf16.mxu0 0
    %678 = vmatpush1.bf16.msra.mxu0 %v355
    %679 = vmatprep.subr.bf16.mxu0 0
    %680 = vmatpush1.bf16.msra.mxu0 %v356
    %681 = vmatprep.subr.bf16.mxu0 0
    %682 = vmatpush1.bf16.msra.mxu0 %v357
    %683 = vmatprep.subr.bf16.mxu0 0
    %684 = vmatpush1.bf16.msra.mxu0 %v358
    %685 = vmatprep.subr.bf16.mxu0 0
    %686 = vmatpush1.bf16.msra.mxu0 %v359
    %687 = vmatprep.subr.bf16.mxu0 0
    %688 = vmatpush1.bf16.msra.mxu0 0
    %689 = vmatprep.subr.bf16.mxu0 0
    %690 = vmatpush1.bf16.msra.mxu0 0
    %691 = vmatprep.subr.bf16.mxu0 0
    %692 = vmatpush1.bf16.msra.mxu0 0
    %693 = vmatprep.subr.bf16.mxu0 0
    %694 = vmatpush1.bf16.msra.mxu0 0
    %695 = vmatprep.subr.bf16.mxu0 0
    %696 = vmatpush1.bf16.msra.mxu0 0
    %697 = vmatprep.subr.bf16.mxu0 0
    %698 = vmatpush1.bf16.msra.mxu0 0
    %699 = vmatprep.subr.bf16.mxu0 0
    %700 = vmatpush1.bf16.msra.mxu0 0
    %701 = vmatprep.subr.bf16.mxu0 0
    %702 = vmatpush1.bf16.msra.mxu0 0
    %703 = vmatprep.mubr.bf16.mxu0 0
    %704 = vmatmul.mubr.bf16.gmra.mrb[0].mxu0 %v667
    %v705 = vpop.f32.mrb[0].mxu0
    %v706 = vadd.f32 %v315, %v705
    %v707 = vpop.f32.mrb[0].mxu0
    %v708 = vpop.f32.mrb[0].mxu0
    %v709 = vadd.f32 %v315, %v708
    %v710 = vpop.f32.mrb[0].mxu0
    %711 = vmatprep.mubr.bf16.mxu0 0
    %712 = vmatmul.mubr.bf16.gmra.mrb[0].mxu0 %v668
    %v713 = vpop.f32.mrb[0].mxu0
    %v714 = vadd.f32 %v315, %v713
    %v715 = vpop.f32.mrb[0].mxu0
    %v716 = vpop.f32.mrb[0].mxu0
    %v717 = vadd.f32 %v315, %v716
    %v718 = vpop.f32.mrb[0].mxu0
    %719 = vmatprep.mubr.bf16.mxu0 0
    %720 = vmatmul.mubr.bf16.gmra.mrb[0].mxu0 %v669
    %v721 = vpop.f32.mrb[0].mxu0
    %v722 = vadd.f32 %v315, %v721
    %v723 = vpop.f32.mrb[0].mxu0
    %v724 = vpop.f32.mrb[0].mxu0
    %v725 = vadd.f32 %v315, %v724
    %v726 = vpop.f32.mrb[0].mxu0
    %727 = vmatprep.mubr.bf16.mxu0 0
    %728 = vmatmul.mubr.bf16.gmra.mrb[0].mxu0 %v670
    %v729 = vpop.f32.mrb[0].mxu0
    %v730 = vadd.f32 %v315, %v729
    %v731 = vpop.f32.mrb[0].mxu0
    %v732 = vpop.f32.mrb[0].mxu0
    %v733 = vadd.f32 %v315, %v732
    %v734 = vpop.f32.mrb[0].mxu0
    %735 = vdwg.mxu0
    %v736 = vmax.f32 %v706, 0.0
    %v737 = vmax.f32 %v709, 0.0
    %v738 = vmax.f32 %v714, 0.0
    %v739 = vmax.f32 %v717, 0.0
    %v740 = vmax.f32 %v722, 0.0
    %v741 = vmax.f32 %v725, 0.0
    %v742 = vmax.f32 %v730, 0.0
    %v743 = vmax.f32 %v733, 0.0
    %v744 = vmul.f32 %v736, 0.1
    %v745 = vmul.f32 %v737, 0.1
    %v746 = vmul.f32 %v738, 0.1
    %v747 = vmul.f32 %v739, 0.1
    %v748 = vmul.f32 %v740, 0.1
    %v749 = vmul.f32 %v741, 0.1
    %v750 = vmul.f32 %v742, 0.1
    %v751 = vmul.f32 %v743, 0.1
    %v752 = vmul.f32 %v659, 0.9
    %v753 = vmul.f32 %v660, 0.9
    %v754 = vmul.f32 %v661, 0.9
    %v755 = vmul.f32 %v662, 0.9
    %v756 = vmul.f32 %v663, 0.9
    %v757 = vmul.f32 %v664, 0.9
    %v758 = vmul.f32 %v665, 0.9
    %v759 = vmul.f32 %v666, 0.9
    %v760 = vadd.f32 %v744, %v752
    %v761 = vadd.f32 %v745, %v753
    %v762 = vadd.f32 %v746, %v754
    %v763 = vadd.f32 %v747, %v755
    %v764 = vadd.f32 %v748, %v756
    %v765 = vadd.f32 %v749, %v757
    %v766 = vadd.f32 %v750, %v758
    %v767 = vadd.f32 %v751, %v759
    %v768 = vpack.c.bf16 %v761, %v760
    %v769 = vpack.c.bf16 %v763, %v762
    %v770 = vpack.c.bf16 %v765, %v764
    %v771 = vpack.c.bf16 %v767, %v766
    %772 = vmatprep.subr.bf16.mxu0 0
    %773 = vmatpush1.bf16.msra.mxu0 %v352
    %774 = vmatprep.subr.bf16.mxu0 0
    %775 = vmatpush1.bf16.msra.mxu0 %v353
    %776 = vmatprep.subr.bf16.mxu0 0
    %777 = vmatpush1.bf16.msra.mxu0 %v354
    %778 = vmatprep.subr.bf16.mxu0 0
    %779 = vmatpush1.bf16.msra.mxu0 %v355
    %780 = vmatprep.subr.bf16.mxu0 0
    %781 = vmatpush1.bf16.msra.mxu0 %v356
    %782 = vmatprep.subr.bf16.mxu0 0
    %783 = vmatpush1.bf16.msra.mxu0 %v357
    %784 = vmatprep.subr.bf16.mxu0 0
    %785 = vmatpush1.bf16.msra.mxu0 %v358
    %786 = vmatprep.subr.bf16.mxu0 0
    %787 = vmatpush1.bf16.msra.mxu0 %v359
    %788 = vmatprep.subr.bf16.mxu0 0
    %789 = vmatpush1.bf16.msra.mxu0 0
    %790 = vmatprep.subr.bf16.mxu0 0
    %791 = vmatpush1.bf16.msra.mxu0 0
    %792 = vmatprep.subr.bf16.mxu0 0
    %793 = vmatpush1.bf16.msra.mxu0 0
    %794 = vmatprep.subr.bf16.mxu0 0
    %795 = vmatpush1.bf16.msra.mxu0 0
    %796 = vmatprep.subr.bf16.mxu0 0
    %797 = vmatpush1.bf16.msra.mxu0 0
    %798 = vmatprep.subr.bf16.mxu0 0
    %799 = vmatpush1.bf16.msra.mxu0 0
    %800 = vmatprep.subr.bf16.mxu0 0
    %801 = vmatpush1.bf16.msra.mxu0 0
    %802 = vmatprep.subr.bf16.mxu0 0
    %803 = vmatpush1.bf16.msra.mxu0 0
    %804 = vmatprep.mubr.bf16.mxu0 0
    %805 = vmatmul.mubr.bf16.gmra.mrb[0].mxu0 %v768
    %v806 = vpop.f32.mrb[0].mxu0
    %v807 = vadd.f32 %v315, %v806
    %v808 = vpop.f32.mrb[0].mxu0
    %v809 = vpop.f32.mrb[0].mxu0
    %v810 = vadd.f32 %v315, %v809
    %v811 = vpop.f32.mrb[0].mxu0
    %812 = vmatprep.mubr.bf16.mxu0 0
    %813 = vmatmul.mubr.bf16.gmra.mrb[0].mxu0 %v769
    %v814 = vpop.f32.mrb[0].mxu0
    %v815 = vadd.f32 %v315, %v814
    %v816 = vpop.f32.mrb[0].mxu0
    %v817 = vpop.f32.mrb[0].mxu0
    %v818 = vadd.f32 %v315, %v817
    %v819 = vpop.f32.mrb[0].mxu0
    %820 = vmatprep.mubr.bf16.mxu0 0
    %821 = vmatmul.mubr.bf16.gmra.mrb[0].mxu0 %v770
    %v822 = vpop.f32.mrb[0].mxu0
    %v823 = vadd.f32 %v315, %v822
    %v824 = vpop.f32.mrb[0].mxu0
    %v825 = vpop.f32.mrb[0].mxu0
    %v826 = vadd.f32 %v315, %v825
    %v827 = vpop.f32.mrb[0].mxu0
    %828 = vmatprep.mubr.bf16.mxu0 0
    %829 = vmatmul.mubr.bf16.gmra.mrb[0].mxu0 %v771
    %v830 = vpop.f32.mrb[0].mxu0
    %v831 = vadd.f32 %v315, %v830
    %v832 = vpop.f32.mrb[0].mxu0
    %v833 = vpop.f32.mrb[0].mxu0
    %v834 = vadd.f32 %v315, %v833
    %v835 = vpop.f32.mrb[0].mxu0
    %836 = vdwg.mxu0
    %v837 = vmax.f32 %v807, 0.0
    %v838 = vmax.f32 %v810, 0.0
    %v839 = vmax.f32 %v815, 0.0
    %v840 = vmax.f32 %v818, 0.0
    %v841 = vmax.f32 %v823, 0.0
    %v842 = vmax.f32 %v826, 0.0
    %v843 = vmax.f32 %v831, 0.0
    %v844 = vmax.f32 %v834, 0.0
    %v845 = vmul.f32 %v837, 0.1
    %v846 = vmul.f32 %v838, 0.1
    %v847 = vmul.f32 %v839, 0.1
    %v848 = vmul.f32 %v840, 0.1
    %v849 = vmul.f32 %v841, 0.1
    %v850 = vmul.f32 %v842, 0.1
    %v851 = vmul.f32 %v843, 0.1
    %v852 = vmul.f32 %v844, 0.1
    %v853 = vmul.f32 %v760, 0.9
    %v854 = vmul.f32 %v761, 0.9
    %v855 = vmul.f32 %v762, 0.9
    %v856 = vmul.f32 %v763, 0.9
    %v857 = vmul.f32 %v764, 0.9
    %v858 = vmul.f32 %v765, 0.9
    %v859 = vmul.f32 %v766, 0.9
    %v860 = vmul.f32 %v767, 0.9
    %v861 = vadd.f32 %v845, %v853
    %v862 = vadd.f32 %v846, %v854
    %v863 = vadd.f32 %v847, %v855
    %v864 = vadd.f32 %v848, %v856
    %v865 = vadd.f32 %v849, %v857
    %v866 = vadd.f32 %v850, %v858
    %v867 = vadd.f32 %v851, %v859
    %v868 = vadd.f32 %v852, %v860
    %v869 = vpack.c.bf16 %v862, %v861
    %v870 = vpack.c.bf16 %v864, %v863
    %v871 = vpack.c.bf16 %v866, %v865
    %v872 = vpack.c.bf16 %v868, %v867
    %873 = vmatprep.subr.bf16.mxu0 0
    %874 = vmatpush1.bf16.msra.mxu0 %v352
    %875 = vmatprep.subr.bf16.mxu0 0
    %876 = vmatpush1.bf16.msra.mxu0 %v353
    %877 = vmatprep.subr.bf16.mxu0 0
    %878 = vmatpush1.bf16.msra.mxu0 %v354
    %879 = vmatprep.subr.bf16.mxu0 0
    %880 = vmatpush1.bf16.msra.mxu0 %v355
    %881 = vmatprep.subr.bf16.mxu0 0
    %882 = vmatpush1.bf16.msra.mxu0 %v356
    %883 = vmatprep.subr.bf16.mxu0 0
    %884 = vmatpush1.bf16.msra.mxu0 %v357
    %885 = vmatprep.subr.bf16.mxu0 0
    %886 = vmatpush1.bf16.msra.mxu0 %v358
    %887 = vmatprep.subr.bf16.mxu0 0
    %888 = vmatpush1.bf16.msra.mxu0 %v359
    %889 = vmatprep.subr.bf16.mxu0 0
    %890 = vmatpush1.bf16.msra.mxu0 0
    %891 = vmatprep.subr.bf16.mxu0 0
    %892 = vmatpush1.bf16.msra.mxu0 0
    %893 = vmatprep.subr.bf16.mxu0 0
    %894 = vmatpush1.bf16.msra.mxu0 0
    %895 = vmatprep.subr.bf16.mxu0 0
    %896 = vmatpush1.bf16.msra.mxu0 0
    %897 = vmatprep.subr.bf16.mxu0 0
    %898 = vmatpush1.bf16.msra.mxu0 0
    %899 = vmatprep.subr.bf16.mxu0 0
    %900 = vmatpush1.bf16.msra.mxu0 0
    %901 = vmatprep.subr.bf16.mxu0 0
    %902 = vmatpush1.bf16.msra.mxu0 0
    %903 = vmatprep.subr.bf16.mxu0 0
    %904 = vmatpush1.bf16.msra.mxu0 0
    %905 = vmatprep.mubr.bf16.mxu0 0
    %906 = vmatmul.mubr.bf16.gmra.mrb[0].mxu0 %v869
    %v907 = vpop.f32.mrb[0].mxu0
    %v908 = vadd.f32 %v315, %v907
    %v909 = vpop.f32.mrb[0].mxu0
    %v910 = vpop.f32.mrb[0].mxu0
    %v911 = vadd.f32 %v315, %v910
    %v912 = vpop.f32.mrb[0].mxu0
    %913 = vmatprep.mubr.bf16.mxu0 0
    %914 = vmatmul.mubr.bf16.gmra.mrb[0].mxu0 %v870
    %v915 = vpop.f32.mrb[0].mxu0
    %v916 = vadd.f32 %v315, %v915
    %v917 = vpop.f32.mrb[0].mxu0
    %v918 = vpop.f32.mrb[0].mxu0
    %v919 = vadd.f32 %v315, %v918
    %v920 = vpop.f32.mrb[0].mxu0
    %921 = vmatprep.mubr.bf16.mxu0 0
    %922 = vmatmul.mubr.bf16.gmra.mrb[0].mxu0 %v871
    %v923 = vpop.f32.mrb[0].mxu0
    %v924 = vadd.f32 %v315, %v923
    %v925 = vpop.f32.mrb[0].mxu0
    %v926 = vpop.f32.mrb[0].mxu0
    %v927 = vadd.f32 %v315, %v926
    %v928 = vpop.f32.mrb[0].mxu0
    %929 = vmatprep.mubr.bf16.mxu0 0
    %930 = vmatmul.mubr.bf16.gmra.mrb[0].mxu0 %v872
    %v931 = vpop.f32.mrb[0].mxu0
    %v932 = vadd.f32 %v315, %v931
    %v933 = vpop.f32.mrb[0].mxu0
    %v934 = vpop.f32.mrb[0].mxu0
    %v935 = vadd.f32 %v315, %v934
    %v936 = vpop.f32.mrb[0].mxu0
    %937 = vdwg.mxu0
    %v938 = vmax.f32 %v908, 0.0
    %v939 = vmax.f32 %v911, 0.0
    %v940 = vmax.f32 %v916, 0.0
    %v941 = vmax.f32 %v919, 0.0
    %v942 = vmax.f32 %v924, 0.0
    %v943 = vmax.f32 %v927, 0.0
    %v944 = vmax.f32 %v932, 0.0
    %v945 = vmax.f32 %v935, 0.0
    %v946 = vmul.f32 %v938, 0.1
    %v947 = vmul.f32 %v939, 0.1
    %v948 = vmul.f32 %v940, 0.1
    %v949 = vmul.f32 %v941, 0.1
    %v950 = vmul.f32 %v942, 0.1
    %v951 = vmul.f32 %v943, 0.1
    %v952 = vmul.f32 %v944, 0.1
    %v953 = vmul.f32 %v945, 0.1
    %v954 = vmul.f32 %v861, 0.9
    %v955 = vmul.f32 %v862, 0.9
    %v956 = vmul.f32 %v863, 0.9
    %v957 = vmul.f32 %v864, 0.9
    %v958 = vmul.f32 %v865, 0.9
    %v959 = vmul.f32 %v866, 0.9
    %v960 = vmul.f32 %v867, 0.9
    %v961 = vmul.f32 %v868, 0.9
    %v962 = vadd.f32 %v946, %v954
    %v963 = vadd.f32 %v947, %v955
    %v964 = vadd.f32 %v948, %v956
    %v965 = vadd.f32 %v949, %v957
    %v966 = vadd.f32 %v950, %v958
    %v967 = vadd.f32 %v951, %v959
    %v968 = vadd.f32 %v952, %v960
    %v969 = vadd.f32 %v953, %v961
    %v970 = vpack.c.bf16 %v963, %v962
    %v971 = vpack.c.bf16 %v965, %v964
    %v972 = vpack.c.bf16 %v967, %v966
    %v973 = vpack.c.bf16 %v969, %v968
    %974 = vmatprep.subr.bf16.mxu0 0
    %975 = vmatpush1.bf16.msra.mxu0 %v352
    %976 = vmatprep.subr.bf16.mxu0 0
    %977 = vmatpush1.bf16.msra.mxu0 %v353
    %978 = vmatprep.subr.bf16.mxu0 0
    %979 = vmatpush1.bf16.msra.mxu0 %v354
    %980 = vmatprep.subr.bf16.mxu0 0
    %981 = vmatpush1.bf16.msra.mxu0 %v355
    %982 = vmatprep.subr.bf16.mxu0 0
    %983 = vmatpush1.bf16.msra.mxu0 %v356
    %984 = vmatprep.subr.bf16.mxu0 0
    %985 = vmatpush1.bf16.msra.mxu0 %v357
    %986 = vmatprep.subr.bf16.mxu0 0
    %987 = vmatpush1.bf16.msra.mxu0 %v358
    %988 = vmatprep.subr.bf16.mxu0 0
    %989 = vmatpush1.bf16.msra.mxu0 %v359
    %990 = vmatprep.subr.bf16.mxu0 0
    %991 = vmatpush1.bf16.msra.mxu0 0
    %992 = vmatprep.subr.bf16.mxu0 0
    %993 = vmatpush1.bf16.msra.mxu0 0
    %994 = vmatprep.subr.bf16.mxu0 0
    %995 = vmatpush1.bf16.msra.mxu0 0
    %996 = vmatprep.subr.bf16.mxu0 0
    %997 = vmatpush1.bf16.msra.mxu0 0
    %998 = vmatprep.subr.bf16.mxu0 0
    %999 = vmatpush1.bf16.msra.mxu0 0
    %1000 = vmatprep.subr.bf16.mxu0 0
    %1001 = vmatpush1.bf16.msra.mxu0 0
    %1002 = vmatprep.subr.bf16.mxu0 0
    %1003 = vmatpush1.bf16.msra.mxu0 0
    %1004 = vmatprep.subr.bf16.mxu0 0
    %1005 = vmatpush1.bf16.msra.mxu0 0
    %1006 = vmatprep.mubr.bf16.mxu0 0
    %1007 = vmatmul.mubr.bf16.gmra.mrb[0].mxu0 %v970
    %v1008 = vpop.f32.mrb[0].mxu0
    %v1009 = vadd.f32 %v315, %v1008
    %v1010 = vpop.f32.mrb[0].mxu0
    %v1011 = vpop.f32.mrb[0].mxu0
    %v1012 = vadd.f32 %v315, %v1011
    %v1013 = vpop.f32.mrb[0].mxu0
    %1014 = vmatprep.mubr.bf16.mxu0 0
    %1015 = vmatmul.mubr.bf16.gmra.mrb[0].mxu0 %v971
    %v1016 = vpop.f32.mrb[0].mxu0
    %v1017 = vadd.f32 %v315, %v1016
    %v1018 = vpop.f32.mrb[0].mxu0
    %v1019 = vpop.f32.mrb[0].mxu0
    %v1020 = vadd.f32 %v315, %v1019
    %v1021 = vpop.f32.mrb[0].mxu0
    %1022 = vmatprep.mubr.bf16.mxu0 0
    %1023 = vmatmul.mubr.bf16.gmra.mrb[0].mxu0 %v972
    %v1024 = vpop.f32.mrb[0].mxu0
    %v1025 = vadd.f32 %v315, %v1024
    %v1026 = vpop.f32.mrb[0].mxu0
    %v1027 = vpop.f32.mrb[0].mxu0
    %v1028 = vadd.f32 %v315, %v1027
    %v1029 = vpop.f32.mrb[0].mxu0
    %1030 = vmatprep.mubr.bf16.mxu0 0
    %1031 = vmatmul.mubr.bf16.gmra.mrb[0].mxu0 %v973
    %v1032 = vpop.f32.mrb[0].mxu0
    %v1033 = vadd.f32 %v315, %v1032
    %v1034 = vpop.f32.mrb[0].mxu0
    %v1035 = vpop.f32.mrb[0].mxu0
    %v1036 = vadd.f32 %v315, %v1035
    %v1037 = vpop.f32.mrb[0].mxu0
    %1038 = vdwg.mxu0
    %v1039 = vmax.f32 %v1009, 0.0
    %v1040 = vmax.f32 %v1012, 0.0
    %v1041 = vmax.f32 %v1017, 0.0
    %v1042 = vmax.f32 %v1020, 0.0
    %v1043 = vmax.f32 %v1025, 0.0
    %v1044 = vmax.f32 %v1028, 0.0
    %v1045 = vmax.f32 %v1033, 0.0
    %v1046 = vmax.f32 %v1036, 0.0
    %v1047 = vmul.f32 %v1039, 0.1
    %v1048 = vmul.f32 %v1040, 0.1
    %v1049 = vmul.f32 %v1041, 0.1
    %v1050 = vmul.f32 %v1042, 0.1
    %v1051 = vmul.f32 %v1043, 0.1
    %v1052 = vmul.f32 %v1044, 0.1
    %v1053 = vmul.f32 %v1045, 0.1
    %v1054 = vmul.f32 %v1046, 0.1
    %v1055 = vmul.f32 %v962, 0.9
    %v1056 = vmul.f32 %v963, 0.9
    %v1057 = vmul.f32 %v964, 0.9
    %v1058 = vmul.f32 %v965, 0.9
    %v1059 = vmul.f32 %v966, 0.9
    %v1060 = vmul.f32 %v967, 0.9
    %v1061 = vmul.f32 %v968, 0.9
    %v1062 = vmul.f32 %v969, 0.9
    %v1063 = vadd.f32 %v1047, %v1055
    %v1064 = vadd.f32 %v1048, %v1056
    %v1065 = vadd.f32 %v1049, %v1057
    %v1066 = vadd.f32 %v1050, %v1058
    %v1067 = vadd.f32 %v1051, %v1059
    %v1068 = vadd.f32 %v1052, %v1060
    %v1069 = vadd.f32 %v1053, %v1061
    %v1070 = vadd.f32 %v1054, %v1062
    %v1071 = vpack.c.bf16 %v1064, %v1063
    %v1072 = vpack.c.bf16 %v1066, %v1065
    %v1073 = vpack.c.bf16 %v1068, %v1067
    %v1074 = vpack.c.bf16 %v1070, %v1069
    %1075 = vmatprep.subr.bf16.mxu0 0
    %1076 = vmatpush1.bf16.msra.mxu0 %v352
    %1077 = vmatprep.subr.bf16.mxu0 0
    %1078 = vmatpush1.bf16.msra.mxu0 %v353
    %1079 = vmatprep.subr.bf16.mxu0 0
    %1080 = vmatpush1.bf16.msra.mxu0 %v354
    %1081 = vmatprep.subr.bf16.mxu0 0
    %1082 = vmatpush1.bf16.msra.mxu0 %v355
    %1083 = vmatprep.subr.bf16.mxu0 0
    %1084 = vmatpush1.bf16.msra.mxu0 %v356
    %1085 = vmatprep.subr.bf16.mxu0 0
    %1086 = vmatpush1.bf16.msra.mxu0 %v357
    %1087 = vmatprep.subr.bf16.mxu0 0
    %1088 = vmatpush1.bf16.msra.mxu0 %v358
    %1089 = vmatprep.subr.bf16.mxu0 0
    %1090 = vmatpush1.bf16.msra.mxu0 %v359
    %1091 = vmatprep.subr.bf16.mxu0 0
    %1092 = vmatpush1.bf16.msra.mxu0 0
    %1093 = vmatprep.subr.bf16.mxu0 0
    %1094 = vmatpush1.bf16.msra.mxu0 0
    %1095 = vmatprep.subr.bf16.mxu0 0
    %1096 = vmatpush1.bf16.msra.mxu0 0
    %1097 = vmatprep.subr.bf16.mxu0 0
    %1098 = vmatpush1.bf16.msra.mxu0 0
    %1099 = vmatprep.subr.bf16.mxu0 0
    %1100 = vmatpush1.bf16.msra.mxu0 0
    %1101 = vmatprep.subr.bf16.mxu0 0
    %1102 = vmatpush1.bf16.msra.mxu0 0
    %1103 = vmatprep.subr.bf16.mxu0 0
    %1104 = vmatpush1.bf16.msra.mxu0 0
    %1105 = vmatprep.subr.bf16.mxu0 0
    %1106 = vmatpush1.bf16.msra.mxu0 0
    %1107 = vmatprep.mubr.bf16.mxu0 0
    %1108 = vmatmul.mubr.bf16.gmra.mrb[0].mxu0 %v1071
    %v1109 = vpop.f32.mrb[0].mxu0
    %v1110 = vadd.f32 %v315, %v1109
    %v1111 = vpop.f32.mrb[0].mxu0
    %v1112 = vpop.f32.mrb[0].mxu0
    %v1113 = vadd.f32 %v315, %v1112
    %v1114 = vpop.f32.mrb[0].mxu0
    %1115 = vmatprep.mubr.bf16.mxu0 0
    %1116 = vmatmul.mubr.bf16.gmra.mrb[0].mxu0 %v1072
    %v1117 = vpop.f32.mrb[0].mxu0
    %v1118 = vadd.f32 %v315, %v1117
    %v1119 = vpop.f32.mrb[0].mxu0
    %v1120 = vpop.f32.mrb[0].mxu0
    %v1121 = vadd.f32 %v315, %v1120
    %v1122 = vpop.f32.mrb[0].mxu0
    %1123 = vmatprep.mubr.bf16.mxu0 0
    %1124 = vmatmul.mubr.bf16.gmra.mrb[0].mxu0 %v1073
    %v1125 = vpop.f32.mrb[0].mxu0
    %v1126 = vadd.f32 %v315, %v1125
    %v1127 = vpop.f32.mrb[0].mxu0
    %v1128 = vpop.f32.mrb[0].mxu0
    %v1129 = vadd.f32 %v315, %v1128
    %v1130 = vpop.f32.mrb[0].mxu0
    %1131 = vmatprep.mubr.bf16.mxu0 0
    %1132 = vmatmul.mubr.bf16.gmra.mrb[0].mxu0 %v1074
    %v1133 = vpop.f32.mrb[0].mxu0
    %v1134 = vadd.f32 %v315, %v1133
    %v1135 = vpop.f32.mrb[0].mxu0
    %v1136 = vpop.f32.mrb[0].mxu0
    %v1137 = vadd.f32 %v315, %v1136
    %v1138 = vpop.f32.mrb[0].mxu0
    %1139 = vdwg.mxu0
    %v1140 = vmax.f32 %v1110, 0.0
    %v1141 = vmax.f32 %v1113, 0.0
    %v1142 = vmax.f32 %v1118, 0.0
    %v1143 = vmax.f32 %v1121, 0.0
    %v1144 = vmax.f32 %v1126, 0.0
    %v1145 = vmax.f32 %v1129, 0.0
    %v1146 = vmax.f32 %v1134, 0.0
    %v1147 = vmax.f32 %v1137, 0.0
    %v1148 = vmul.f32 %v1140, 0.1
    %v1149 = vmul.f32 %v1141, 0.1
    %v1150 = vmul.f32 %v1142, 0.1
    %v1151 = vmul.f32 %v1143, 0.1
    %v1152 = vmul.f32 %v1144, 0.1
    %v1153 = vmul.f32 %v1145, 0.1
    %v1154 = vmul.f32 %v1146, 0.1
    %v1155 = vmul.f32 %v1147, 0.1
    %v1156 = vmul.f32 %v1063, 0.9
    %v1157 = vmul.f32 %v1064, 0.9
    %v1158 = vmul.f32 %v1065, 0.9
    %v1159 = vmul.f32 %v1066, 0.9
    %v1160 = vmul.f32 %v1067, 0.9
    %v1161 = vmul.f32 %v1068, 0.9
    %v1162 = vmul.f32 %v1069, 0.9
    %v1163 = vmul.f32 %v1070, 0.9
    %v1164 = vadd.f32 %v1148, %v1156
    %v1165 = vadd.f32 %v1149, %v1157
    %v1166 = vadd.f32 %v1150, %v1158
    %v1167 = vadd.f32 %v1151, %v1159
    %v1168 = vadd.f32 %v1152, %v1160
    %v1169 = vadd.f32 %v1153, %v1161
    %v1170 = vadd.f32 %v1154, %v1162
    %v1171 = vadd.f32 %v1155, %v1163
    %v1172 = vpack.c.bf16 %v1165, %v1164
    %v1173 = vpack.c.bf16 %v1167, %v1166
    %v1174 = vpack.c.bf16 %v1169, %v1168
    %v1175 = vpack.c.bf16 %v1171, %v1170
    %1176 = vmatprep.subr.bf16.mxu0 0
    %1177 = vmatpush1.bf16.msra.mxu0 %v352
    %1178 = vmatprep.subr.bf16.mxu0 0
    %1179 = vmatpush1.bf16.msra.mxu0 %v353
    %1180 = vmatprep.subr.bf16.mxu0 0
    %1181 = vmatpush1.bf16.msra.mxu0 %v354
    %1182 = vmatprep.subr.bf16.mxu0 0
    %1183 = vmatpush1.bf16.msra.mxu0 %v355
    %1184 = vmatprep.subr.bf16.mxu0 0
    %1185 = vmatpush1.bf16.msra.mxu0 %v356
    %1186 = vmatprep.subr.bf16.mxu0 0
    %1187 = vmatpush1.bf16.msra.mxu0 %v357
    %1188 = vmatprep.subr.bf16.mxu0 0
    %1189 = vmatpush1.bf16.msra.mxu0 %v358
    %1190 = vmatprep.subr.bf16.mxu0 0
    %1191 = vmatpush1.bf16.msra.mxu0 %v359
    %1192 = vmatprep.subr.bf16.mxu0 0
    %1193 = vmatpush1.bf16.msra.mxu0 0
    %1194 = vmatprep.subr.bf16.mxu0 0
    %1195 = vmatpush1.bf16.msra.mxu0 0
    %1196 = vmatprep.subr.bf16.mxu0 0
    %1197 = vmatpush1.bf16.msra.mxu0 0
    %1198 = vmatprep.subr.bf16.mxu0 0
    %1199 = vmatpush1.bf16.msra.mxu0 0
    %1200 = vmatprep.subr.bf16.mxu0 0
    %1201 = vmatpush1.bf16.msra.mxu0 0
    %1202 = vmatprep.subr.bf16.mxu0 0
    %1203 = vmatpush1.bf16.msra.mxu0 0
    %1204 = vmatprep.subr.bf16.mxu0 0
    %1205 = vmatpush1.bf16.msra.mxu0 0
    %1206 = vmatprep.subr.bf16.mxu0 0
    %1207 = vmatpush1.bf16.msra.mxu0 0
    %1208 = vmatprep.mubr.bf16.mxu0 0
    %1209 = vmatmul.mubr.bf16.gmra.mrb[0].mxu0 %v1172
    %v1210 = vpop.f32.mrb[0].mxu0
    %v1211 = vadd.f32 %v315, %v1210
    %v1212 = vpop.f32.mrb[0].mxu0
    %v1213 = vpop.f32.mrb[0].mxu0
    %v1214 = vadd.f32 %v315, %v1213
    %v1215 = vpop.f32.mrb[0].mxu0
    %1216 = vmatprep.mubr.bf16.mxu0 0
    %1217 = vmatmul.mubr.bf16.gmra.mrb[0].mxu0 %v1173
    %v1218 = vpop.f32.mrb[0].mxu0
    %v1219 = vadd.f32 %v315, %v1218
    %v1220 = vpop.f32.mrb[0].mxu0
    %v1221 = vpop.f32.mrb[0].mxu0
    %v1222 = vadd.f32 %v315, %v1221
    %v1223 = vpop.f32.mrb[0].mxu0
    %1224 = vmatprep.mubr.bf16.mxu0 0
    %1225 = vmatmul.mubr.bf16.gmra.mrb[0].mxu0 %v1174
    %v1226 = vpop.f32.mrb[0].mxu0
    %v1227 = vadd.f32 %v315, %v1226
    %v1228 = vpop.f32.mrb[0].mxu0
    %v1229 = vpop.f32.mrb[0].mxu0
    %v1230 = vadd.f32 %v315, %v1229
    %v1231 = vpop.f32.mrb[0].mxu0
    %1232 = vmatprep.mubr.bf16.mxu0 0
    %1233 = vmatmul.mubr.bf16.gmra.mrb[0].mxu0 %v1175
    %v1234 = vpop.f32.mrb[0].mxu0
    %v1235 = vadd.f32 %v315, %v1234
    %v1236 = vpop.f32.mrb[0].mxu0
    %v1237 = vpop.f32.mrb[0].mxu0
    %v1238 = vadd.f32 %v315, %v1237
    %v1239 = vpop.f32.mrb[0].mxu0
    %1240 = vdwg.mxu0
    %v1241 = vmax.f32 %v1211, 0.0
    %v1242 = vmax.f32 %v1214, 0.0
    %v1243 = vmax.f32 %v1219, 0.0
    %v1244 = vmax.f32 %v1222, 0.0
    %v1245 = vmax.f32 %v1227, 0.0
    %v1246 = vmax.f32 %v1230, 0.0
    %v1247 = vmax.f32 %v1235, 0.0
    %v1248 = vmax.f32 %v1238, 0.0
    %v1249 = vmul.f32 %v1241, 0.1
    %v1250 = vmul.f32 %v1242, 0.1
    %v1251 = vmul.f32 %v1243, 0.1
    %v1252 = vmul.f32 %v1244, 0.1
    %v1253 = vmul.f32 %v1245, 0.1
    %v1254 = vmul.f32 %v1246, 0.1
    %v1255 = vmul.f32 %v1247, 0.1
    %v1256 = vmul.f32 %v1248, 0.1
    %v1257 = vmul.f32 %v1164, 0.9
    %v1258 = vmul.f32 %v1165, 0.9
    %v1259 = vmul.f32 %v1166, 0.9
    %v1260 = vmul.f32 %v1167, 0.9
    %v1261 = vmul.f32 %v1168, 0.9
    %v1262 = vmul.f32 %v1169, 0.9
    %v1263 = vmul.f32 %v1170, 0.9
    %v1264 = vmul.f32 %v1171, 0.9
    %v1265 = vadd.f32 %v1249, %v1257
    %v1266 = vadd.f32 %v1250, %v1258
    %v1267 = vadd.f32 %v1251, %v1259
    %v1268 = vadd.f32 %v1252, %v1260
    %v1269 = vadd.f32 %v1253, %v1261
    %v1270 = vadd.f32 %v1254, %v1262
    %v1271 = vadd.f32 %v1255, %v1263
    %v1272 = vadd.f32 %v1256, %v1264
    %v1273 = vpack.c.bf16 %v1266, %v1265
    %v1274 = vpack.c.bf16 %v1268, %v1267
    %v1275 = vpack.c.bf16 %v1270, %v1269
    %v1276 = vpack.c.bf16 %v1272, %v1271
    %1277 = vmatprep.subr.bf16.mxu0 0
    %1278 = vmatpush1.bf16.msra.mxu0 %v352
    %1279 = vmatprep.subr.bf16.mxu0 0
    %1280 = vmatpush1.bf16.msra.mxu0 %v353
    %1281 = vmatprep.subr.bf16.mxu0 0
    %1282 = vmatpush1.bf16.msra.mxu0 %v354
    %1283 = vmatprep.subr.bf16.mxu0 0
    %1284 = vmatpush1.bf16.msra.mxu0 %v355
    %1285 = vmatprep.subr.bf16.mxu0 0
    %1286 = vmatpush1.bf16.msra.mxu0 %v356
    %1287 = vmatprep.subr.bf16.mxu0 0
    %1288 = vmatpush1.bf16.msra.mxu0 %v357
    %1289 = vmatprep.subr.bf16.mxu0 0
    %1290 = vmatpush1.bf16.msra.mxu0 %v358
    %1291 = vmatprep.subr.bf16.mxu0 0
    %1292 = vmatpush1.bf16.msra.mxu0 %v359
    %1293 = vmatprep.subr.bf16.mxu0 0
    %1294 = vmatpush1.bf16.msra.mxu0 0
    %1295 = vmatprep.subr.bf16.mxu0 0
    %1296 = vmatpush1.bf16.msra.mxu0 0
    %1297 = vmatprep.subr.bf16.mxu0 0
    %1298 = vmatpush1.bf16.msra.mxu0 0
    %1299 = vmatprep.subr.bf16.mxu0 0
    %1300 = vmatpush1.bf16.msra.mxu0 0
    %1301 = vmatprep.subr.bf16.mxu0 0
    %1302 = vmatpush1.bf16.msra.mxu0 0
    %1303 = vmatprep.subr.bf16.mxu0 0
    %1304 = vmatpush1.bf16.msra.mxu0 0
    %1305 = vmatprep.subr.bf16.mxu0 0
    %1306 = vmatpush1.bf16.msra.mxu0 0
    %1307 = vmatprep.subr.bf16.mxu0 0
    %1308 = vmatpush1.bf16.msra.mxu0 0
    %1309 = vmatprep.mubr.bf16.mxu0 0
    %1310 = vmatmul.mubr.bf16.gmra.mrb[0].mxu0 %v1273
    %v1311 = vpop.f32.mrb[0].mxu0
    %v1312 = vadd.f32 %v315, %v1311
    %v1313 = vpop.f32.mrb[0].mxu0
    %v1314 = vpop.f32.mrb[0].mxu0
    %v1315 = vadd.f32 %v315, %v1314
    %v1316 = vpop.f32.mrb[0].mxu0
    %1317 = vmatprep.mubr.bf16.mxu0 0
    %1318 = vmatmul.mubr.bf16.gmra.mrb[0].mxu0 %v1274
    %v1319 = vpop.f32.mrb[0].mxu0
    %v1320 = vadd.f32 %v315, %v1319
    %v1321 = vpop.f32.mrb[0].mxu0
    %v1322 = vpop.f32.mrb[0].mxu0
    %v1323 = vadd.f32 %v315, %v1322
    %v1324 = vpop.f32.mrb[0].mxu0
    %1325 = vmatprep.mubr.bf16.mxu0 0
    %1326 = vmatmul.mubr.bf16.gmra.mrb[0].mxu0 %v1275
    %v1327 = vpop.f32.mrb[0].mxu0
    %v1328 = vadd.f32 %v315, %v1327
    %v1329 = vpop.f32.mrb[0].mxu0
    %v1330 = vpop.f32.mrb[0].mxu0
    %v1331 = vadd.f32 %v315, %v1330
    %v1332 = vpop.f32.mrb[0].mxu0
    %1333 = vmatprep.mubr.bf16.mxu0 0
    %1334 = vmatmul.mubr.bf16.gmra.mrb[0].mxu0 %v1276
    %v1335 = vpop.f32.mrb[0].mxu0
    %v1336 = vadd.f32 %v315, %v1335
    %v1337 = vpop.f32.mrb[0].mxu0
    %v1338 = vpop.f32.mrb[0].mxu0
    %v1339 = vadd.f32 %v315, %v1338
    %v1340 = vpop.f32.mrb[0].mxu0
    %1341 = vdwg.mxu0
    %v1342 = vmax.f32 %v1312, 0.0
    %v1343 = vmax.f32 %v1315, 0.0
    %v1344 = vmax.f32 %v1320, 0.0
    %v1345 = vmax.f32 %v1323, 0.0
    %v1346 = vmax.f32 %v1328, 0.0
    %v1347 = vmax.f32 %v1331, 0.0
    %v1348 = vmax.f32 %v1336, 0.0
    %v1349 = vmax.f32 %v1339, 0.0
    %v1350 = vmul.f32 %v1342, 0.1
    %v1351 = vmul.f32 %v1343, 0.1
    %v1352 = vmul.f32 %v1344, 0.1
    %v1353 = vmul.f32 %v1345, 0.1
    %v1354 = vmul.f32 %v1346, 0.1
    %v1355 = vmul.f32 %v1347, 0.1
    %v1356 = vmul.f32 %v1348, 0.1
    %v1357 = vmul.f32 %v1349, 0.1
    %v1358 = vmul.f32 %v1265, 0.9
    %v1359 = vmul.f32 %v1266, 0.9
    %v1360 = vmul.f32 %v1267, 0.9
    %v1361 = vmul.f32 %v1268, 0.9
    %v1362 = vmul.f32 %v1269, 0.9
    %v1363 = vmul.f32 %v1270, 0.9
    %v1364 = vmul.f32 %v1271, 0.9
    %v1365 = vmul.f32 %v1272, 0.9
    %v1366 = vadd.f32 %v1350, %v1358
    %v1367 = vadd.f32 %v1351, %v1359
    %v1368 = vadd.f32 %v1352, %v1360
    %v1369 = vadd.f32 %v1353, %v1361
    %v1370 = vadd.f32 %v1354, %v1362
    %v1371 = vadd.f32 %v1355, %v1363
    %v1372 = vadd.f32 %v1356, %v1364
    %v1373 = vadd.f32 %v1357, %v1365
    %v1374 = vpack.c.bf16 %v1367, %v1366
    %v1375 = vpack.c.bf16 %v1369, %v1368
    %v1376 = vpack.c.bf16 %v1371, %v1370
    %v1377 = vpack.c.bf16 %v1373, %v1372
    %v1394 = vunpack.c.l.b16 %v69
    %v1395 = vunpack.c.l.b16 %v70
    %v1396 = vunpack.c.l.b16 %v71
    %v1397 = vunpack.c.l.b16 %v72
    %v1398 = vunpack.c.l.b16 %v73
    %v1399 = vunpack.c.l.b16 %v74
    %v1400 = vunpack.c.l.b16 %v75
    %v1401 = vunpack.c.l.b16 %v76
    %v1402 = vunpack.c.l.b16 %v77
    %v1403 = vunpack.c.l.b16 %v78
    %v1404 = vunpack.c.l.b16 %v79
    %v1405 = vunpack.c.l.b16 %v80
    %v1406 = vunpack.c.l.b16 %v81
    %v1407 = vunpack.c.l.b16 %v82
    %v1408 = vunpack.c.l.b16 %v83
    %v1409 = vunpack.c.l.b16 %v84
    %v1410 = vpack.c.b16 %v1395, %v1394
    %v1411 = vpack.c.b16 %v1397, %v1396
    %v1412 = vpack.c.b16 %v1399, %v1398
    %v1413 = vpack.c.b16 %v1401, %v1400
    %v1414 = vpack.c.b16 %v1403, %v1402
    %v1415 = vpack.c.b16 %v1405, %v1404
    %v1416 = vpack.c.b16 %v1407, %v1406
    %v1417 = vpack.c.b16 %v1409, %v1408
    %1426 = vmatprep.subr.bf16.mxu0 0
    %1427 = vmatpush1.bf16.msra.mxu0 %v1410
    %1428 = vmatprep.subr.bf16.mxu0 0
    %1429 = vmatpush1.bf16.msra.mxu0 %v1411
    %1430 = vmatprep.subr.bf16.mxu0 0
    %1431 = vmatpush1.bf16.msra.mxu0 %v1412
    %1432 = vmatprep.subr.bf16.mxu0 0
    %1433 = vmatpush1.bf16.msra.mxu0 %v1413
    %1434 = vmatprep.subr.bf16.mxu0 0
    %1435 = vmatpush1.bf16.msra.mxu0 %v1414
    %1436 = vmatprep.subr.bf16.mxu0 0
    %1437 = vmatpush1.bf16.msra.mxu0 %v1415
    %1438 = vmatprep.subr.bf16.mxu0 0
    %1439 = vmatpush1.bf16.msra.mxu0 %v1416
    %1440 = vmatprep.subr.bf16.mxu0 0
    %1441 = vmatpush1.bf16.msra.mxu0 %v1417
    %1442 = vmatprep.subr.bf16.mxu0 0
    %1443 = vmatpush1.bf16.msra.mxu0 0
    %1444 = vmatprep.subr.bf16.mxu0 0
    %1445 = vmatpush1.bf16.msra.mxu0 0
    %1446 = vmatprep.subr.bf16.mxu0 0
    %1447 = vmatpush1.bf16.msra.mxu0 0
    %1448 = vmatprep.subr.bf16.mxu0 0
    %1449 = vmatpush1.bf16.msra.mxu0 0
    %1450 = vmatprep.subr.bf16.mxu0 0
    %1451 = vmatpush1.bf16.msra.mxu0 0
    %1452 = vmatprep.subr.bf16.mxu0 0
    %1453 = vmatpush1.bf16.msra.mxu0 0
    %1454 = vmatprep.subr.bf16.mxu0 0
    %1455 = vmatpush1.bf16.msra.mxu0 0
    %1456 = vmatprep.subr.bf16.mxu0 0
    %1457 = vmatpush1.bf16.msra.mxu0 0
    %1458 = vmatprep.mubr.bf16.mxu0 0
    %1459 = vmatmul.mubr.bf16.gmra.mrb[0].mxu0 %v1374
    %v1460 = vpop.f32.mrb[0].mxu0
    %v1461 = vadd.f32 0.0, %v1460
    %v1462 = vpop.f32.mrb[0].mxu0
    %v1463 = vpop.f32.mrb[0].mxu0
    %v1464 = vadd.f32 0.0, %v1463
    %v1465 = vpop.f32.mrb[0].mxu0
    %1466 = vmatprep.mubr.bf16.mxu0 0
    %1467 = vmatmul.mubr.bf16.gmra.mrb[0].mxu0 %v1375
    %v1468 = vpop.f32.mrb[0].mxu0
    %v1469 = vadd.f32 0.0, %v1468
    %v1470 = vpop.f32.mrb[0].mxu0
    %v1471 = vpop.f32.mrb[0].mxu0
    %v1472 = vadd.f32 0.0, %v1471
    %v1473 = vpop.f32.mrb[0].mxu0
    %1474 = vmatprep.mubr.bf16.mxu0 0
    %1475 = vmatmul.mubr.bf16.gmra.mrb[0].mxu0 %v1376
    %v1476 = vpop.f32.mrb[0].mxu0
    %v1477 = vadd.f32 0.0, %v1476
    %v1478 = vpop.f32.mrb[0].mxu0
    %v1479 = vpop.f32.mrb[0].mxu0
    %v1480 = vadd.f32 0.0, %v1479
    %v1481 = vpop.f32.mrb[0].mxu0
    %1482 = vmatprep.mubr.bf16.mxu0 0
    %1483 = vmatmul.mubr.bf16.gmra.mrb[0].mxu0 %v1377
    %v1484 = vpop.f32.mrb[0].mxu0
    %v1485 = vadd.f32 0.0, %v1484
    %v1486 = vpop.f32.mrb[0].mxu0
    %v1487 = vpop.f32.mrb[0].mxu0
    %v1488 = vadd.f32 0.0, %v1487
    %v1489 = vpop.f32.mrb[0].mxu0
    %1490 = vdwg.mxu0
    %v1491 = vpack.c.bf16 %v1464, %v1461
    %v1492 = vpack.c.bf16 %v1472, %v1469
    %v1493 = vpack.c.bf16 %v1480, %v1477
    %v1494 = vpack.c.bf16 %v1488, %v1485
    %v1495 = vlaneseq
    %v1496 = vshrl.u32 %v1495, 7
    %v1497 = vsub.s32 0, %v1496
    %v1498 = vrot.slane %v87, %v1497
    %1499 = vmatprep.subr.bf16.mxu0 0
    %1500 = vmatpush1.bf16.msra.mxu0 %v1491
    %1501 = vmatprep.subr.bf16.mxu0 0
    %1502 = vmatpush1.bf16.msra.mxu0 %v1492
    %1503 = vmatprep.subr.bf16.mxu0 0
    %1504 = vmatpush1.bf16.msra.mxu0 %v1493
    %1505 = vmatprep.subr.bf16.mxu0 0
    %1506 = vmatpush1.bf16.msra.mxu0 %v1494
    %1507 = vmatprep.subr.bf16.mxu0 0
    %1508 = vmatpush1.bf16.msra.mxu0 0
    %1509 = vmatprep.subr.bf16.mxu0 0
    %1510 = vmatpush1.bf16.msra.mxu0 0
    %1511 = vmatprep.subr.bf16.mxu0 0
    %1512 = vmatpush1.bf16.msra.mxu0 0
    %1513 = vmatprep.subr.bf16.mxu0 0
    %1514 = vmatpush1.bf16.msra.mxu0 0
    %1515 = vmatprep.subr.bf16.mxu0 0
    %1516 = vmatpush1.bf16.msra.mxu0 0
    %1517 = vmatprep.subr.bf16.mxu0 0
    %1518 = vmatpush1.bf16.msra.mxu0 0
    %1519 = vmatprep.subr.bf16.mxu0 0
    %1520 = vmatpush1.bf16.msra.mxu0 0
    %1521 = vmatprep.subr.bf16.mxu0 0
    %1522 = vmatpush1.bf16.msra.mxu0 0
    %1523 = vmatprep.subr.bf16.mxu0 0
    %1524 = vmatpush1.bf16.msra.mxu0 0
    %1525 = vmatprep.subr.bf16.mxu0 0
    %1526 = vmatpush1.bf16.msra.mxu0 0
    %1527 = vmatprep.subr.bf16.mxu0 0
    %1528 = vmatpush1.bf16.msra.mxu0 0
    %1529 = vmatprep.subr.bf16.mxu0 0
    %1530 = vmatpush1.bf16.msra.mxu0 0
    %1531 = vmatprep.mubr.bf16.mxu0 0
    %1532 = vmatmul.mubr.bf16.gmra.mrb[0].mxu0 %v228
    %v1533 = vpop.f32.mrb[0].mxu0
    %v1534 = vadd.f32 %v1498, %v1533
    %v1535 = vpop.f32.mrb[0].mxu0
    %v1536 = vpop.f32.mrb[0].mxu0
    %v1537 = vadd.f32 %v1498, %v1536
    %v1538 = vpop.f32.mrb[0].mxu0
    %1539 = vmatprep.mubr.bf16.mxu0 0
    %1540 = vmatmul.mubr.bf16.gmra.mrb[0].mxu0 %v231
    %v1541 = vpop.f32.mrb[0].mxu0
    %v1542 = vadd.f32 %v1498, %v1541
    %v1543 = vpop.f32.mrb[0].mxu0
    %v1544 = vpop.f32.mrb[0].mxu0
    %v1545 = vadd.f32 %v1498, %v1544
    %v1546 = vpop.f32.mrb[0].mxu0
    %1547 = vmatprep.mubr.bf16.mxu0 0
    %1548 = vmatmul.mubr.bf16.gmra.mrb[0].mxu0 %v234
    %v1549 = vpop.f32.mrb[0].mxu0
    %v1550 = vadd.f32 %v1498, %v1549
    %v1551 = vpop.f32.mrb[0].mxu0
    %v1552 = vpop.f32.mrb[0].mxu0
    %v1553 = vadd.f32 %v1498, %v1552
    %v1554 = vpop.f32.mrb[0].mxu0
    %1555 = vmatprep.mubr.bf16.mxu0 0
    %1556 = vmatmul.mubr.bf16.gmra.mrb[0].mxu0 %v237
    %v1557 = vpop.f32.mrb[0].mxu0
    %v1558 = vadd.f32 %v1498, %v1557
    %v1559 = vpop.f32.mrb[0].mxu0
    %v1560 = vpop.f32.mrb[0].mxu0
    %v1561 = vadd.f32 %v1498, %v1560
    %v1562 = vpop.f32.mrb[0].mxu0
    %1563 = vdwg.mxu0
    %v1564 = vlaneseq
    %v1565 = vand.u32 %v1564, 127
    %vm1566 = vcmp.lt.s32.totalorder %v1565, 8
    %v1567 = vsel %vm1566, %v1534, -1e+30
    %v1568 = vsel %vm1566, %v1537, -1e+30
    %v1569 = vsel %vm1566, %v1542, -1e+30
    %v1570 = vsel %vm1566, %v1545, -1e+30
    %v1571 = vsel %vm1566, %v1550, -1e+30
    %v1572 = vsel %vm1566, %v1553, -1e+30
    %v1573 = vsel %vm1566, %v1558, -1e+30
    %v1574 = vsel %vm1566, %v1561, -1e+30
    %1575 = vmax.xlane.f32.xlu0 %v1567
    %v1576 = vpop.xlane.xlu0 %1575
    %1577 = vmax.xlane.f32.xlu0 %v1568
    %v1578 = vpop.xlane.xlu0 %1577
    %1579 = vmax.xlane.f32.xlu0 %v1569
    %v1580 = vpop.xlane.xlu0 %1579
    %1581 = vmax.xlane.f32.xlu0 %v1570
    %v1582 = vpop.xlane.xlu0 %1581
    %1583 = vmax.xlane.f32.xlu0 %v1571
    %v1584 = vpop.xlane.xlu0 %1583
    %1585 = vmax.xlane.f32.xlu0 %v1572
    %v1586 = vpop.xlane.xlu0 %1585
    %1587 = vmax.xlane.f32.xlu0 %v1573
    %v1588 = vpop.xlane.xlu0 %1587
    %1589 = vmax.xlane.f32.xlu0 %v1574
    %v1590 = vpop.xlane.xlu0 %1589
    %v1591 = vsub.f32 %v1567, %v1576
    %v1592 = vsub.f32 %v1568, %v1578
    %v1593 = vsub.f32 %v1569, %v1580
    %v1594 = vsub.f32 %v1570, %v1582
    %v1595 = vsub.f32 %v1571, %v1584
    %v1596 = vsub.f32 %v1572, %v1586
    %v1597 = vsub.f32 %v1573, %v1588
    %v1598 = vsub.f32 %v1574, %v1590
    %v1599 = vmul.f32 %v1591, 1.442695
    %v1600 = vpow.pop %v1599
    %v1601 = vmul.f32 %v1592, 1.442695
    %v1602 = vpow.pop %v1601
    %v1603 = vmul.f32 %v1593, 1.442695
    %v1604 = vpow.pop %v1603
    %v1605 = vmul.f32 %v1594, 1.442695
    %v1606 = vpow.pop %v1605
    %v1607 = vmul.f32 %v1595, 1.442695
    %v1608 = vpow.pop %v1607
    %v1609 = vmul.f32 %v1596, 1.442695
    %v1610 = vpow.pop %v1609
    %v1611 = vmul.f32 %v1597, 1.442695
    %v1612 = vpow.pop %v1611
    %v1613 = vmul.f32 %v1598, 1.442695
    %v1614 = vpow.pop %v1613
    %1615 = vadd.xlane.f32.xlu0 %v1600
    %v1616 = vpop.xlane.xlu0 %1615
    %1617 = vadd.xlane.f32.xlu0 %v1602
    %v1618 = vpop.xlane.xlu0 %1617
    %1619 = vadd.xlane.f32.xlu0 %v1604
    %v1620 = vpop.xlane.xlu0 %1619
    %1621 = vadd.xlane.f32.xlu0 %v1606
    %v1622 = vpop.xlane.xlu0 %1621
    %1623 = vadd.xlane.f32.xlu0 %v1608
    %v1624 = vpop.xlane.xlu0 %1623
    %1625 = vadd.xlane.f32.xlu0 %v1610
    %v1626 = vpop.xlane.xlu0 %1625
    %1627 = vadd.xlane.f32.xlu0 %v1612
    %v1628 = vpop.xlane.xlu0 %1627
    %1629 = vadd.xlane.f32.xlu0 %v1614
    %v1630 = vpop.xlane.xlu0 %1629
    %v1631 = vlog2.pop %v1616
    %v1632 = vmul.f32 %v1631, 0.6931472
    %v1633 = vlog2.pop %v1618
    %v1634 = vmul.f32 %v1633, 0.6931472
    %v1635 = vlog2.pop %v1620
    %v1636 = vmul.f32 %v1635, 0.6931472
    %v1637 = vlog2.pop %v1622
    %v1638 = vmul.f32 %v1637, 0.6931472
    %v1639 = vlog2.pop %v1624
    %v1640 = vmul.f32 %v1639, 0.6931472
    %v1641 = vlog2.pop %v1626
    %v1642 = vmul.f32 %v1641, 0.6931472
    %v1643 = vlog2.pop %v1628
    %v1644 = vmul.f32 %v1643, 0.6931472
    %v1645 = vlog2.pop %v1630
    %v1646 = vmul.f32 %v1645, 0.6931472
    %v1647 = vsub.f32 %v1591, %v1632
    %v1648 = vsub.f32 %v1592, %v1634
    %v1649 = vsub.f32 %v1593, %v1636
    %v1650 = vsub.f32 %v1594, %v1638
    %v1651 = vsub.f32 %v1595, %v1640
    %v1652 = vsub.f32 %v1596, %v1642
    %v1653 = vsub.f32 %v1597, %v1644
    %v1654 = vsub.f32 %v1598, %v1646
    %1655 = vst [vmem:[#allocation5] sm:$0xff] %v1647
    %1656 = vst [vmem:[#allocation5 + $0x8] sm:$0xff] %v1648
    %1657 = vst [vmem:[#allocation5 + $0x10] sm:$0xff] %v1649
    %1658 = vst [vmem:[#allocation5 + $0x18] sm:$0xff] %v1650
    %1659 = vst [vmem:[#allocation5 + $0x20] sm:$0xff] %v1651
    %1660 = vst [vmem:[#allocation5 + $0x28] sm:$0xff] %v1652
    %1661 = vst [vmem:[#allocation5 + $0x30] sm:$0xff] %v1653
    %1662 = vst [vmem:[#allocation5 + $0x38] sm:$0xff] %v1654
    // Predicated region
    $region22: #{tpu_custom_call.1} parent=1 // pred_check
      _
    $region23: #{tpu_custom_call.1} parent=1 // pred_check_branch
      %1664 = sbr.rel (0) target = $region25
    $region24: #{tpu_custom_call.1} parent=1 // pred_region
      %s1666 = ssub.s32 1024, 1024
      %1667 = vsyncadd [#allocation4], %s1666
      %s1668 = sshll.u32 [#allocation5], 4
      %s1669 = int_to_ptr.vmem [resolvable:$true] %s1668
      %1674 = dma.vmem_to_hbm [thread:$0]  %s1669, 1024, %s4, [#allocation4], 128, 128, 8
    $region25: #{tpu_custom_call.1} parent=1 // pred_fallthru
      _
    // Predicated region
    $region26: #{tpu_custom_call.1} parent=1 // pred_check
      _
    $region27: #{tpu_custom_call.1} parent=1 // pred_check_branch
      %1676 = sbr.rel (0) target = $region29
    $region28: #{tpu_custom_call.1} parent=1 // pred_region
      %1677 = dma.done [#allocation4], 1024
    $region29: #{tpu_custom_call.1} parent=1 // pred_fallthru
      _
    %1678 = vsyncpa [#allocation3], 1
    %1679 = vsyncpa [#allocation4], 1

</llo_original>
